<compile_context>
chip_gen: v7x
topology: tpu7x:2x2x1
jax: 0.10.0
libtpu: 0.0.40
codegen_flags: <defaults>
</compile_context>

<pallas_src>
import numpy as np
import jax
import jax.numpy as jnp
from jax import lax
from jax.experimental import pallas as pl
from jax.experimental.pallas import tpu as pltpu


def _build_constants(H, W, Kp, Whp):
    """DFT bases built host-side in float64 with integer (j*k) mod N reduction."""
    sH = 1.0 / np.sqrt(H)        # shared by forward & inverse row DFT -> 1/H total
    sW = 1.0 / W                 # folded into the forward column DFT

    jh = np.arange(H)
    ph = np.mod(np.outer(jh, jh), H).astype(np.float64)
    CH = np.cos(2.0 * np.pi * ph / H)
    SH = np.sin(2.0 * np.pi * ph / H)
    CSH = (np.concatenate([CH, SH], axis=0) * sH).astype(np.float32)      # (2H, H)

    jw = np.arange(W)
    kk = np.arange(Kp)
    kmask = (kk < Whp).astype(np.float64)
    pw = np.mod(np.outer(jw, kk), W).astype(np.float64)
    CW = (np.cos(2.0 * np.pi * pw / W) * kmask * sW).astype(np.float32)   # (W, Kp)
    SW = (np.sin(2.0 * np.pi * pw / W) * kmask * sW).astype(np.float32)   # (W, Kp)

    # hermitian weights (1 at k=0 and k=W/2, else 2); zero in the padded lanes
    wgt = np.where((kk == 0) | ((W % 2 == 0) & (kk == W // 2)), 1.0, 2.0) * kmask
    pk = np.mod(np.outer(kk, jw), W).astype(np.float64)
    A = (wgt[:, None] * np.cos(2.0 * np.pi * pk / W)).astype(np.float32)   # (Kp, W)
    Bm = (-wgt[:, None] * np.sin(2.0 * np.pi * pk / W)).astype(np.float32) # (Kp, W)
    return CSH, CW, SW, A, Bm


def _make_kernel(TN, H, W, Kp):
    f32 = jnp.float32

    def kernel(m_ref, csh_ref, cw_ref, sw_ref, a_ref, b_ref, p_ref, o_ref,
               c1_sc, s1_sc, zr_sc, zi_sc):
        # (TN, H, W) block -> (TN*H, W) slab; layout-free when H % 8 == 0.
        Ms = m_ref[...].reshape(TN * H, W).astype(f32)
        CSH = csh_ref[...]                      # (2H, H)  [cos_H; sin_H] / sqrt(H)
        Pt = p_ref[...]                         # (H, Kp)  half-spectrum multiplier

        # ---- column (W-axis) forward half-spectrum DFT, all images at once ----
        c1_sc[...] = jnp.dot(Ms, cw_ref[...], preferred_element_type=f32)  # C1
        s1_sc[...] = jnp.dot(Ms, sw_ref[...], preferred_element_type=f32)  # S1

        def per_image(t, carry):
            start = t * H
            if not isinstance(start, int) and H % 8 == 0:
                start = pl.multiple_of(start, 8)
            rows = pl.ds(start, H)
            C1 = c1_sc[rows, :]                 # (H, Kp)
            S1 = s1_sc[rows, :]
            # row (H-axis) forward DFT with the stacked [cos; sin] basis
            F2c = jnp.dot(CSH, C1, preferred_element_type=f32)   # [UC; VC]
            F2s = jnp.dot(CSH, S1, preferred_element_type=f32)   # [US; VS]
            # X = fftn(M)[:, :W//2+1]:  Xr = UC - VS, Xi = -(US + VC);  Y = P * X
            Yr = Pt * (F2c[:H, :] - F2s[H:, :])
            Yi = -(Pt * (F2s[:H, :] + F2c[H:, :]))
            # row (H-axis) inverse DFT (the second 1/sqrt(H) lives in CSH)
            F3r = jnp.dot(CSH, Yr, preferred_element_type=f32)
            F3i = jnp.dot(CSH, Yi, preferred_element_type=f32)
            zr_sc[rows, :] = F3r[:H, :] - F3i[H:, :]    # Re(ifft_H(Y))
            zi_sc[rows, :] = F3i[:H, :] + F3r[H:, :]    # Im(ifft_H(Y))
            return carry

        if TN <= 16:                      # short trip-count: fully unrolled
            for t in range(TN):
                per_image(t, 0)
        else:                             # large batches: bounded live ranges
            lax.fori_loop(0, TN, per_image, 0)

        # ---- column (W-axis) inverse real FFT (hermitian synthesis), batched ----
        out = (jnp.dot(zr_sc[...], a_ref[...], preferred_element_type=f32)
               + jnp.dot(zi_sc[...], b_ref[...], preferred_element_type=f32))
        o_ref[...] = out.reshape(TN, H, W).astype(o_ref.dtype)

    return kernel


def fourier_preconditioner_forward(M, P, *, block_bytes=256 * 1024,
                                   scratch_bytes=8 * 1024 * 1024):
    """Applies irfftn(fftn(M)*P) to an NCHW tensor M with a real (H, W) multiplier P."""
    B, C, H, W = M.shape
    N = B * C
    Whp = W // 2 + 1
    Kp = ((Whp + 127) // 128) * 128          # lane-tile aligned half-spectrum width

    # Keep the slab in its native dtype when it is a supported MXU input dtype
    # (halves HBM traffic for bf16 callers); otherwise fall back to f32.
    if M.dtype == jnp.float32 or M.dtype == jnp.bfloat16:
        Mk = M.reshape(N, H, W)
    else:
        Mk = M.reshape(N, H, W).astype(jnp.float32)
    out_dtype = Mk.dtype
    in_bytes = jnp.dtype(Mk.dtype).itemsize
    out_bytes = jnp.dtype(out_dtype).itemsize

    # ---- images per grid step: divisor of N, sized for a healthy block, G >= 2 ---
    cap_block = max(1, block_bytes // (H * W * in_bytes))
    cap_scratch = max(1, scratch_bytes // (4 * H * Kp * 4))
    tn_target = min(N, cap_block, cap_scratch)
    if N >= 2:
        tn_target = min(tn_target, max(1, N // 2))   # G >= 2 for v7x's two TensorCores
    TN = max(d for d in range(1, tn_target + 1) if N % d == 0)
    G = N // TN

    # ---- constants and multiplier ------------------------------------------------
    CSH, CW, SW, A, Bm = _build_constants(H, W, Kp, Whp)
    Pk = jnp.asarray(P, jnp.float32)[:, :Whp]
    Pk = jnp.pad(Pk, ((0, 0), (0, Kp - Whp)))                        # (H, Kp)

    const_bytes = 4 * (CSH.size + CW.size + SW.size + A.size + Bm.size + H * Kp)
    blk_bytes = TN * H * W * (in_bytes + out_bytes)
    scratch_b = 4 * TN * H * Kp * 4
    vmem_need = 2 * blk_bytes + 2 * const_bytes + scratch_b
    vmem_limit = int(min(max(32 << 20, 2 * vmem_need), 48 << 20))

    flops = N * Kp * (8 * H * W + 16 * H * H)
    cost = pl.CostEstimate(
        flops=int(flops), transcendentals=0,
        bytes_accessed=int(N * H * W * (in_bytes + out_bytes) + const_bytes))

    kernel = _make_kernel(TN, H, W, Kp)

    out = pl.pallas_call(
        kernel,
        out_shape=jax.ShapeDtypeStruct((N, H, W), out_dtype),
        grid=(G,),
        in_specs=[
            pl.BlockSpec((TN, H, W), lambda i: (i, 0, 0)),       # image block (NCHW slab)
            pl.BlockSpec((2 * H, H), lambda i: (0, 0)),          # stacked row-DFT basis
            pl.BlockSpec((W, Kp), lambda i: (0, 0)),             # cos column DFT
            pl.BlockSpec((W, Kp), lambda i: (0, 0)),             # sin column DFT
            pl.BlockSpec((Kp, W), lambda i: (0, 0)),             # hermitian synthesis (cos)
            pl.BlockSpec((Kp, W), lambda i: (0, 0)),             # hermitian synthesis (sin)
            pl.BlockSpec((H, Kp), lambda i: (0, 0)),             # multiplier P
        ],
        out_specs=pl.BlockSpec((TN, H, W), lambda i: (i, 0, 0)),
        scratch_shapes=[pltpu.VMEM((TN * H, Kp), jnp.float32) for _ in range(4)],
        compiler_params=pltpu.CompilerParams(
            dimension_semantics=("parallel",),
            vmem_limit_bytes=vmem_limit),
        cost_estimate=cost,
    )(Mk, jnp.asarray(CSH), jnp.asarray(CW), jnp.asarray(SW),
      jnp.asarray(A), jnp.asarray(Bm), Pk)

    return out.reshape(B, C, H, W)


def _reference_forward(M, P):
    # Pure-JAX reference with the exact torch.fft semantics:
    # irfftn(fftn(M, dim=(-2,-1)) * P, s=(H,W), dim=(-2,-1))
    H, W = M.shape[-2], M.shape[-1]
    X = jnp.fft.fftn(M, axes=(-2, -1)) * P
    return jnp.fft.irfftn(X, s=(H, W), axes=(-2, -1))


if __name__ == "__main__":
    B, C, H, W = 2, 4, 16, 16
    key = jax.random.PRNGKey(0)
    k1, k2 = jax.random.split(key)
    M = jax.random.normal(k1, (B, C, H, W), dtype=jnp.float32)
    # Deterministic real positive diagonal multiplier (shape (H, W),
    # broadcast over batch/channel) — stands in for the `_P` buffer.
    P = 0.5 + jax.random.uniform(k2, (H, W), dtype=jnp.float32)

    out = fourier_preconditioner_forward(M, P)
    out = jax.block_until_ready(out)

    ref = _reference_forward(M, P)
    np.testing.assert_allclose(np.asarray(out), np.asarray(ref),
                               rtol=2e-3, atol=2e-3)
    assert out.shape == (B, C, H, W) and out.dtype == jnp.float32
    print("KERNEL_OK")
</pallas_src>

<mosaic_0001>
module attributes {stable_mosaic.version = 11 : i64} {
  func.func @kernel(%arg0: i32, %arg1: memref<4x16x16xf32, #tpu.memory_space<vmem>>, %arg2: memref<32x16xf32, #tpu.memory_space<vmem>>, %arg3: memref<16x128xf32, #tpu.memory_space<vmem>>, %arg4: memref<16x128xf32, #tpu.memory_space<vmem>>, %arg5: memref<128x16xf32, #tpu.memory_space<vmem>>, %arg6: memref<128x16xf32, #tpu.memory_space<vmem>>, %arg7: memref<16x128xf32, #tpu.memory_space<vmem>>, %arg8: memref<4x16x16xf32, #tpu.memory_space<vmem>>, %arg9: memref<64x128xf32, #tpu.memory_space<vmem>>, %arg10: memref<64x128xf32, #tpu.memory_space<vmem>>, %arg11: memref<64x128xf32, #tpu.memory_space<vmem>>, %arg12: memref<64x128xf32, #tpu.memory_space<vmem>>) attributes {dimension_semantics = [#tpu.dimension_semantics<parallel>], iteration_bounds = array<i64: 2>, scalar_prefetch = 0 : i64, scratch_operands = 4 : i64, tpu.core_type = #tpu.core_type<tc>, window_params = [{transform_indices = @transform_0, window_bounds = array<i64: 4, 16, 16>}, {pipeline_mode = #tpu.pipeline_mode<synchronous>, transform_indices = @transform_1, window_bounds = array<i64: 32, 16>}, {pipeline_mode = #tpu.pipeline_mode<synchronous>, transform_indices = @transform_2, window_bounds = array<i64: 16, 128>}, {pipeline_mode = #tpu.pipeline_mode<synchronous>, transform_indices = @transform_3, window_bounds = array<i64: 16, 128>}, {pipeline_mode = #tpu.pipeline_mode<synchronous>, transform_indices = @transform_4, window_bounds = array<i64: 128, 16>}, {pipeline_mode = #tpu.pipeline_mode<synchronous>, transform_indices = @transform_5, window_bounds = array<i64: 128, 16>}, {pipeline_mode = #tpu.pipeline_mode<synchronous>, transform_indices = @transform_6, window_bounds = array<i64: 16, 128>}, {transform_indices = @transform_7, window_bounds = array<i64: 4, 16, 16>}]} {
    %c0 = arith.constant 0 : index
    %c0_0 = arith.constant 0 : index
    %c0_1 = arith.constant 0 : index
    %0 = vector.load %arg1[%c0, %c0_0, %c0_1] : memref<4x16x16xf32, #tpu.memory_space<vmem>>, vector<4x16x16xf32>
    %1 = vector.shape_cast %0 : vector<4x16x16xf32> to vector<64x16xf32>
    %c0_2 = arith.constant 0 : index
    %c0_3 = arith.constant 0 : index
    %2 = vector.load %arg2[%c0_2, %c0_3] : memref<32x16xf32, #tpu.memory_space<vmem>>, vector<32x16xf32>
    %c0_4 = arith.constant 0 : index
    %c0_5 = arith.constant 0 : index
    %3 = vector.load %arg7[%c0_4, %c0_5] : memref<16x128xf32, #tpu.memory_space<vmem>>, vector<16x128xf32>
    %c0_6 = arith.constant 0 : index
    %c0_7 = arith.constant 0 : index
    %4 = vector.load %arg3[%c0_6, %c0_7] : memref<16x128xf32, #tpu.memory_space<vmem>>, vector<16x128xf32>
    %cst = arith.constant dense<0.000000e+00> : vector<64x128xf32>
    %5 = tpu.matmul %1, %4, %cst {dimension_numbers = #tpu.dot_dimension_numbers<[1], [0], [0], [1], [0, 0, 1, 1], [], []>} : vector<64x16xf32>, vector<16x128xf32>, vector<64x128xf32> -> vector<64x128xf32>
    %c0_8 = arith.constant 0 : index
    %c0_9 = arith.constant 0 : index
    %6 = vector.load %arg9[%c0_8, %c0_9] : memref<64x128xf32, #tpu.memory_space<vmem>>, vector<64x128xf32>
    tpu.vector_store %arg9[%c0_8, %c0_9], %5 {strides = array<i32>} : memref<64x128xf32, #tpu.memory_space<vmem>>, vector<64x128xf32>,
    %c0_10 = arith.constant 0 : index
    %c0_11 = arith.constant 0 : index
    %7 = vector.load %arg4[%c0_10, %c0_11] : memref<16x128xf32, #tpu.memory_space<vmem>>, vector<16x128xf32>
    %cst_12 = arith.constant dense<0.000000e+00> : vector<64x128xf32>
    %8 = tpu.matmul %1, %7, %cst_12 {dimension_numbers = #tpu.dot_dimension_numbers<[1], [0], [0], [1], [0, 0, 1, 1], [], []>} : vector<64x16xf32>, vector<16x128xf32>, vector<64x128xf32> -> vector<64x128xf32>
    %c0_13 = arith.constant 0 : index
    %c0_14 = arith.constant 0 : index
    %9 = vector.load %arg10[%c0_13, %c0_14] : memref<64x128xf32, #tpu.memory_space<vmem>>, vector<64x128xf32>
    tpu.vector_store %arg10[%c0_13, %c0_14], %8 {strides = array<i32>} : memref<64x128xf32, #tpu.memory_space<vmem>>, vector<64x128xf32>,
    %c0_15 = arith.constant 0 : index
    %c0_16 = arith.constant 0 : index
    %10 = vector.load %arg9[%c0_15, %c0_16] : memref<64x128xf32, #tpu.memory_space<vmem>>, vector<16x128xf32>
    %c0_17 = arith.constant 0 : index
    %c0_18 = arith.constant 0 : index
    %11 = vector.load %arg10[%c0_17, %c0_18] : memref<64x128xf32, #tpu.memory_space<vmem>>, vector<16x128xf32>
    %cst_19 = arith.constant dense<0.000000e+00> : vector<32x128xf32>
    %12 = tpu.matmul %2, %10, %cst_19 {dimension_numbers = #tpu.dot_dimension_numbers<[1], [0], [0], [1], [0, 0, 1, 1], [], []>} : vector<32x16xf32>, vector<16x128xf32>, vector<32x128xf32> -> vector<32x128xf32>
    %cst_20 = arith.constant dense<0.000000e+00> : vector<32x128xf32>
    %13 = tpu.matmul %2, %11, %cst_20 {dimension_numbers = #tpu.dot_dimension_numbers<[1], [0], [0], [1], [0, 0, 1, 1], [], []>} : vector<32x16xf32>, vector<16x128xf32>, vector<32x128xf32> -> vector<32x128xf32>
    %14 = vector.extract_strided_slice %12 {offsets = [0, 0], sizes = [16, 128], strides = [1, 1]} : vector<32x128xf32> to vector<16x128xf32>
    %15 = vector.extract_strided_slice %13 {offsets = [16, 0], sizes = [16, 128], strides = [1, 1]} : vector<32x128xf32> to vector<16x128xf32>
    %16 = arith.subf %14, %15 : vector<16x128xf32>
    %17 = arith.mulf %3, %16 : vector<16x128xf32>
    %18 = vector.extract_strided_slice %13 {offsets = [0, 0], sizes = [16, 128], strides = [1, 1]} : vector<32x128xf32> to vector<16x128xf32>
    %19 = vector.extract_strided_slice %12 {offsets = [16, 0], sizes = [16, 128], strides = [1, 1]} : vector<32x128xf32> to vector<16x128xf32>
    %20 = arith.addf %18, %19 : vector<16x128xf32>
    %21 = arith.mulf %3, %20 : vector<16x128xf32>
    %cst_21 = arith.constant 0.000000e+00 : f32
    %22 = vector.broadcast %cst_21 : f32 to vector<16x128xf32>
    %23 = arith.subf %22, %21 : vector<16x128xf32>
    %cst_22 = arith.constant dense<0.000000e+00> : vector<32x128xf32>
    %24 = tpu.matmul %2, %17, %cst_22 {dimension_numbers = #tpu.dot_dimension_numbers<[1], [0], [0], [1], [0, 0, 1, 1], [], []>} : vector<32x16xf32>, vector<16x128xf32>, vector<32x128xf32> -> vector<32x128xf32>
    %cst_23 = arith.constant dense<0.000000e+00> : vector<32x128xf32>
    %25 = tpu.matmul %2, %23, %cst_23 {dimension_numbers = #tpu.dot_dimension_numbers<[1], [0], [0], [1], [0, 0, 1, 1], [], []>} : vector<32x16xf32>, vector<16x128xf32>, vector<32x128xf32> -> vector<32x128xf32>
    %26 = vector.extract_strided_slice %24 {offsets = [0, 0], sizes = [16, 128], strides = [1, 1]} : vector<32x128xf32> to vector<16x128xf32>
    %27 = vector.extract_strided_slice %25 {offsets = [16, 0], sizes = [16, 128], strides = [1, 1]} : vector<32x128xf32> to vector<16x128xf32>
    %28 = arith.subf %26, %27 : vector<16x128xf32>
    %c0_24 = arith.constant 0 : index
    %c0_25 = arith.constant 0 : index
    %29 = vector.load %arg11[%c0_24, %c0_25] : memref<64x128xf32, #tpu.memory_space<vmem>>, vector<16x128xf32>
    tpu.vector_store %arg11[%c0_24, %c0_25], %28 {strides = array<i32>} : memref<64x128xf32, #tpu.memory_space<vmem>>, vector<16x128xf32>,
    %30 = vector.extract_strided_slice %25 {offsets = [0, 0], sizes = [16, 128], strides = [1, 1]} : vector<32x128xf32> to vector<16x128xf32>
    %31 = vector.extract_strided_slice %24 {offsets = [16, 0], sizes = [16, 128], strides = [1, 1]} : vector<32x128xf32> to vector<16x128xf32>
    %32 = arith.addf %30, %31 : vector<16x128xf32>
    %c0_26 = arith.constant 0 : index
    %c0_27 = arith.constant 0 : index
    %33 = vector.load %arg12[%c0_26, %c0_27] : memref<64x128xf32, #tpu.memory_space<vmem>>, vector<16x128xf32>
    tpu.vector_store %arg12[%c0_26, %c0_27], %32 {strides = array<i32>} : memref<64x128xf32, #tpu.memory_space<vmem>>, vector<16x128xf32>,
    %c16 = arith.constant 16 : index
    %c0_28 = arith.constant 0 : index
    %34 = vector.load %arg9[%c16, %c0_28] : memref<64x128xf32, #tpu.memory_space<vmem>>, vector<16x128xf32>
    %c16_29 = arith.constant 16 : index
    %c0_30 = arith.constant 0 : index
    %35 = vector.load %arg10[%c16_29, %c0_30] : memref<64x128xf32, #tpu.memory_space<vmem>>, vector<16x128xf32>
    %cst_31 = arith.constant dense<0.000000e+00> : vector<32x128xf32>
    %36 = tpu.matmul %2, %34, %cst_31 {dimension_numbers = #tpu.dot_dimension_numbers<[1], [0], [0], [1], [0, 0, 1, 1], [], []>} : vector<32x16xf32>, vector<16x128xf32>, vector<32x128xf32> -> vector<32x128xf32>
    %cst_32 = arith.constant dense<0.000000e+00> : vector<32x128xf32>
    %37 = tpu.matmul %2, %35, %cst_32 {dimension_numbers = #tpu.dot_dimension_numbers<[1], [0], [0], [1], [0, 0, 1, 1], [], []>} : vector<32x16xf32>, vector<16x128xf32>, vector<32x128xf32> -> vector<32x128xf32>
    %38 = vector.extract_strided_slice %36 {offsets = [0, 0], sizes = [16, 128], strides = [1, 1]} : vector<32x128xf32> to vector<16x128xf32>
    %39 = vector.extract_strided_slice %37 {offsets = [16, 0], sizes = [16, 128], strides = [1, 1]} : vector<32x128xf32> to vector<16x128xf32>
    %40 = arith.subf %38, %39 : vector<16x128xf32>
    %41 = arith.mulf %3, %40 : vector<16x128xf32>
    %42 = vector.extract_strided_slice %37 {offsets = [0, 0], sizes = [16, 128], strides = [1, 1]} : vector<32x128xf32> to vector<16x128xf32>
    %43 = vector.extract_strided_slice %36 {offsets = [16, 0], sizes = [16, 128], strides = [1, 1]} : vector<32x128xf32> to vector<16x128xf32>
    %44 = arith.addf %42, %43 : vector<16x128xf32>
    %45 = arith.mulf %3, %44 : vector<16x128xf32>
    %cst_33 = arith.constant 0.000000e+00 : f32
    %46 = vector.broadcast %cst_33 : f32 to vector<16x128xf32>
    %47 = arith.subf %46, %45 : vector<16x128xf32>
    %cst_34 = arith.constant dense<0.000000e+00> : vector<32x128xf32>
    %48 = tpu.matmul %2, %41, %cst_34 {dimension_numbers = #tpu.dot_dimension_numbers<[1], [0], [0], [1], [0, 0, 1, 1], [], []>} : vector<32x16xf32>, vector<16x128xf32>, vector<32x128xf32> -> vector<32x128xf32>
    %cst_35 = arith.constant dense<0.000000e+00> : vector<32x128xf32>
    %49 = tpu.matmul %2, %47, %cst_35 {dimension_numbers = #tpu.dot_dimension_numbers<[1], [0], [0], [1], [0, 0, 1, 1], [], []>} : vector<32x16xf32>, vector<16x128xf32>, vector<32x128xf32> -> vector<32x128xf32>
    %50 = vector.extract_strided_slice %48 {offsets = [0, 0], sizes = [16, 128], strides = [1, 1]} : vector<32x128xf32> to vector<16x128xf32>
    %51 = vector.extract_strided_slice %49 {offsets = [16, 0], sizes = [16, 128], strides = [1, 1]} : vector<32x128xf32> to vector<16x128xf32>
    %52 = arith.subf %50, %51 : vector<16x128xf32>
    %c16_36 = arith.constant 16 : index
    %c0_37 = arith.constant 0 : index
    %53 = vector.load %arg11[%c16_36, %c0_37] : memref<64x128xf32, #tpu.memory_space<vmem>>, vector<16x128xf32>
    tpu.vector_store %arg11[%c16_36, %c0_37], %52 {strides = array<i32>} : memref<64x128xf32, #tpu.memory_space<vmem>>, vector<16x128xf32>,
    %54 = vector.extract_strided_slice %49 {offsets = [0, 0], sizes = [16, 128], strides = [1, 1]} : vector<32x128xf32> to vector<16x128xf32>
    %55 = vector.extract_strided_slice %48 {offsets = [16, 0], sizes = [16, 128], strides = [1, 1]} : vector<32x128xf32> to vector<16x128xf32>
    %56 = arith.addf %54, %55 : vector<16x128xf32>
    %c16_38 = arith.constant 16 : index
    %c0_39 = arith.constant 0 : index
    %57 = vector.load %arg12[%c16_38, %c0_39] : memref<64x128xf32, #tpu.memory_space<vmem>>, vector<16x128xf32>
    tpu.vector_store %arg12[%c16_38, %c0_39], %56 {strides = array<i32>} : memref<64x128xf32, #tpu.memory_space<vmem>>, vector<16x128xf32>,
    %c32 = arith.constant 32 : index
    %c0_40 = arith.constant 0 : index
    %58 = vector.load %arg9[%c32, %c0_40] : memref<64x128xf32, #tpu.memory_space<vmem>>, vector<16x128xf32>
    %c32_41 = arith.constant 32 : index
    %c0_42 = arith.constant 0 : index
    %59 = vector.load %arg10[%c32_41, %c0_42] : memref<64x128xf32, #tpu.memory_space<vmem>>, vector<16x128xf32>
    %cst_43 = arith.constant dense<0.000000e+00> : vector<32x128xf32>
    %60 = tpu.matmul %2, %58, %cst_43 {dimension_numbers = #tpu.dot_dimension_numbers<[1], [0], [0], [1], [0, 0, 1, 1], [], []>} : vector<32x16xf32>, vector<16x128xf32>, vector<32x128xf32> -> vector<32x128xf32>
    %cst_44 = arith.constant dense<0.000000e+00> : vector<32x128xf32>
    %61 = tpu.matmul %2, %59, %cst_44 {dimension_numbers = #tpu.dot_dimension_numbers<[1], [0], [0], [1], [0, 0, 1, 1], [], []>} : vector<32x16xf32>, vector<16x128xf32>, vector<32x128xf32> -> vector<32x128xf32>
    %62 = vector.extract_strided_slice %60 {offsets = [0, 0], sizes = [16, 128], strides = [1, 1]} : vector<32x128xf32> to vector<16x128xf32>
    %63 = vector.extract_strided_slice %61 {offsets = [16, 0], sizes = [16, 128], strides = [1, 1]} : vector<32x128xf32> to vector<16x128xf32>
    %64 = arith.subf %62, %63 : vector<16x128xf32>
    %65 = arith.mulf %3, %64 : vector<16x128xf32>
    %66 = vector.extract_strided_slice %61 {offsets = [0, 0], sizes = [16, 128], strides = [1, 1]} : vector<32x128xf32> to vector<16x128xf32>
    %67 = vector.extract_strided_slice %60 {offsets = [16, 0], sizes = [16, 128], strides = [1, 1]} : vector<32x128xf32> to vector<16x128xf32>
    %68 = arith.addf %66, %67 : vector<16x128xf32>
    %69 = arith.mulf %3, %68 : vector<16x128xf32>
    %cst_45 = arith.constant 0.000000e+00 : f32
    %70 = vector.broadcast %cst_45 : f32 to vector<16x128xf32>
    %71 = arith.subf %70, %69 : vector<16x128xf32>
    %cst_46 = arith.constant dense<0.000000e+00> : vector<32x128xf32>
    %72 = tpu.matmul %2, %65, %cst_46 {dimension_numbers = #tpu.dot_dimension_numbers<[1], [0], [0], [1], [0, 0, 1, 1], [], []>} : vector<32x16xf32>, vector<16x128xf32>, vector<32x128xf32> -> vector<32x128xf32>
    %cst_47 = arith.constant dense<0.000000e+00> : vector<32x128xf32>
    %73 = tpu.matmul %2, %71, %cst_47 {dimension_numbers = #tpu.dot_dimension_numbers<[1], [0], [0], [1], [0, 0, 1, 1], [], []>} : vector<32x16xf32>, vector<16x128xf32>, vector<32x128xf32> -> vector<32x128xf32>
    %74 = vector.extract_strided_slice %72 {offsets = [0, 0], sizes = [16, 128], strides = [1, 1]} : vector<32x128xf32> to vector<16x128xf32>
    %75 = vector.extract_strided_slice %73 {offsets = [16, 0], sizes = [16, 128], strides = [1, 1]} : vector<32x128xf32> to vector<16x128xf32>
    %76 = arith.subf %74, %75 : vector<16x128xf32>
    %c32_48 = arith.constant 32 : index
    %c0_49 = arith.constant 0 : index
    %77 = vector.load %arg11[%c32_48, %c0_49] : memref<64x128xf32, #tpu.memory_space<vmem>>, vector<16x128xf32>
    tpu.vector_store %arg11[%c32_48, %c0_49], %76 {strides = array<i32>} : memref<64x128xf32, #tpu.memory_space<vmem>>, vector<16x128xf32>,
    %78 = vector.extract_strided_slice %73 {offsets = [0, 0], sizes = [16, 128], strides = [1, 1]} : vector<32x128xf32> to vector<16x128xf32>
    %79 = vector.extract_strided_slice %72 {offsets = [16, 0], sizes = [16, 128], strides = [1, 1]} : vector<32x128xf32> to vector<16x128xf32>
    %80 = arith.addf %78, %79 : vector<16x128xf32>
    %c32_50 = arith.constant 32 : index
    %c0_51 = arith.constant 0 : index
    %81 = vector.load %arg12[%c32_50, %c0_51] : memref<64x128xf32, #tpu.memory_space<vmem>>, vector<16x128xf32>
    tpu.vector_store %arg12[%c32_50, %c0_51], %80 {strides = array<i32>} : memref<64x128xf32, #tpu.memory_space<vmem>>, vector<16x128xf32>,
    %c48 = arith.constant 48 : index
    %c0_52 = arith.constant 0 : index
    %82 = vector.load %arg9[%c48, %c0_52] : memref<64x128xf32, #tpu.memory_space<vmem>>, vector<16x128xf32>
    %c48_53 = arith.constant 48 : index
    %c0_54 = arith.constant 0 : index
    %83 = vector.load %arg10[%c48_53, %c0_54] : memref<64x128xf32, #tpu.memory_space<vmem>>, vector<16x128xf32>
    %cst_55 = arith.constant dense<0.000000e+00> : vector<32x128xf32>
    %84 = tpu.matmul %2, %82, %cst_55 {dimension_numbers = #tpu.dot_dimension_numbers<[1], [0], [0], [1], [0, 0, 1, 1], [], []>} : vector<32x16xf32>, vector<16x128xf32>, vector<32x128xf32> -> vector<32x128xf32>
    %cst_56 = arith.constant dense<0.000000e+00> : vector<32x128xf32>
    %85 = tpu.matmul %2, %83, %cst_56 {dimension_numbers = #tpu.dot_dimension_numbers<[1], [0], [0], [1], [0, 0, 1, 1], [], []>} : vector<32x16xf32>, vector<16x128xf32>, vector<32x128xf32> -> vector<32x128xf32>
    %86 = vector.extract_strided_slice %84 {offsets = [0, 0], sizes = [16, 128], strides = [1, 1]} : vector<32x128xf32> to vector<16x128xf32>
    %87 = vector.extract_strided_slice %85 {offsets = [16, 0], sizes = [16, 128], strides = [1, 1]} : vector<32x128xf32> to vector<16x128xf32>
    %88 = arith.subf %86, %87 : vector<16x128xf32>
    %89 = arith.mulf %3, %88 : vector<16x128xf32>
    %90 = vector.extract_strided_slice %85 {offsets = [0, 0], sizes = [16, 128], strides = [1, 1]} : vector<32x128xf32> to vector<16x128xf32>
    %91 = vector.extract_strided_slice %84 {offsets = [16, 0], sizes = [16, 128], strides = [1, 1]} : vector<32x128xf32> to vector<16x128xf32>
    %92 = arith.addf %90, %91 : vector<16x128xf32>
    %93 = arith.mulf %3, %92 : vector<16x128xf32>
    %cst_57 = arith.constant 0.000000e+00 : f32
    %94 = vector.broadcast %cst_57 : f32 to vector<16x128xf32>
    %95 = arith.subf %94, %93 : vector<16x128xf32>
    %cst_58 = arith.constant dense<0.000000e+00> : vector<32x128xf32>
    %96 = tpu.matmul %2, %89, %cst_58 {dimension_numbers = #tpu.dot_dimension_numbers<[1], [0], [0], [1], [0, 0, 1, 1], [], []>} : vector<32x16xf32>, vector<16x128xf32>, vector<32x128xf32> -> vector<32x128xf32>
    %cst_59 = arith.constant dense<0.000000e+00> : vector<32x128xf32>
    %97 = tpu.matmul %2, %95, %cst_59 {dimension_numbers = #tpu.dot_dimension_numbers<[1], [0], [0], [1], [0, 0, 1, 1], [], []>} : vector<32x16xf32>, vector<16x128xf32>, vector<32x128xf32> -> vector<32x128xf32>
    %98 = vector.extract_strided_slice %96 {offsets = [0, 0], sizes = [16, 128], strides = [1, 1]} : vector<32x128xf32> to vector<16x128xf32>
    %99 = vector.extract_strided_slice %97 {offsets = [16, 0], sizes = [16, 128], strides = [1, 1]} : vector<32x128xf32> to vector<16x128xf32>
    %100 = arith.subf %98, %99 : vector<16x128xf32>
    %c48_60 = arith.constant 48 : index
    %c0_61 = arith.constant 0 : index
    %101 = vector.load %arg11[%c48_60, %c0_61] : memref<64x128xf32, #tpu.memory_space<vmem>>, vector<16x128xf32>
    tpu.vector_store %arg11[%c48_60, %c0_61], %100 {strides = array<i32>} : memref<64x128xf32, #tpu.memory_space<vmem>>, vector<16x128xf32>,
    %102 = vector.extract_strided_slice %97 {offsets = [0, 0], sizes = [16, 128], strides = [1, 1]} : vector<32x128xf32> to vector<16x128xf32>
    %103 = vector.extract_strided_slice %96 {offsets = [16, 0], sizes = [16, 128], strides = [1, 1]} : vector<32x128xf32> to vector<16x128xf32>
    %104 = arith.addf %102, %103 : vector<16x128xf32>
    %c48_62 = arith.constant 48 : index
    %c0_63 = arith.constant 0 : index
    %105 = vector.load %arg12[%c48_62, %c0_63] : memref<64x128xf32, #tpu.memory_space<vmem>>, vector<16x128xf32>
    tpu.vector_store %arg12[%c48_62, %c0_63], %104 {strides = array<i32>} : memref<64x128xf32, #tpu.memory_space<vmem>>, vector<16x128xf32>,
    %c0_64 = arith.constant 0 : index
    %c0_65 = arith.constant 0 : index
    %106 = vector.load %arg11[%c0_64, %c0_65] : memref<64x128xf32, #tpu.memory_space<vmem>>, vector<64x128xf32>
    %c0_66 = arith.constant 0 : index
    %c0_67 = arith.constant 0 : index
    %107 = vector.load %arg5[%c0_66, %c0_67] : memref<128x16xf32, #tpu.memory_space<vmem>>, vector<128x16xf32>
    %cst_68 = arith.constant dense<0.000000e+00> : vector<64x16xf32>
    %108 = tpu.matmul %106, %107, %cst_68 {dimension_numbers = #tpu.dot_dimension_numbers<[1], [0], [0], [1], [0, 0, 1, 1], [], []>} : vector<64x128xf32>, vector<128x16xf32>, vector<64x16xf32> -> vector<64x16xf32>
    %c0_69 = arith.constant 0 : index
    %c0_70 = arith.constant 0 : index
    %109 = vector.load %arg12[%c0_69, %c0_70] : memref<64x128xf32, #tpu.memory_space<vmem>>, vector<64x128xf32>
    %c0_71 = arith.constant 0 : index
    %c0_72 = arith.constant 0 : index
    %110 = vector.load %arg6[%c0_71, %c0_72] : memref<128x16xf32, #tpu.memory_space<vmem>>, vector<128x16xf32>
    %cst_73 = arith.constant dense<0.000000e+00> : vector<64x16xf32>
    %111 = tpu.matmul %109, %110, %cst_73 {dimension_numbers = #tpu.dot_dimension_numbers<[1], [0], [0], [1], [0, 0, 1, 1], [], []>} : vector<64x128xf32>, vector<128x16xf32>, vector<64x16xf32> -> vector<64x16xf32>
    %112 = arith.addf %108, %111 : vector<64x16xf32>
    %113 = vector.shape_cast %112 : vector<64x16xf32> to vector<4x16x16xf32>
    %c0_74 = arith.constant 0 : index
    %c0_75 = arith.constant 0 : index
    %c0_76 = arith.constant 0 : index
    %114 = vector.load %arg8[%c0_74, %c0_75, %c0_76] : memref<4x16x16xf32, #tpu.memory_space<vmem>>, vector<4x16x16xf32>
    tpu.vector_store %arg8[%c0_74, %c0_75, %c0_76], %113 {strides = array<i32>} : memref<4x16x16xf32, #tpu.memory_space<vmem>>, vector<4x16x16xf32>,
    return
  }
  func.func @transform_0(%arg0: i32) -> (i32, i32, i32) {
    %c0_i32 = arith.constant 0 : i32
    %c0_i32_0 = arith.constant 0 : i32
    %c0_i32_1 = arith.constant 0 : i32
    return %arg0, %c0_i32, %c0_i32_0 : i32, i32, i32
  }
  func.func @transform_1(%arg0: i32) -> (i32, i32) {
    %c0_i32 = arith.constant 0 : i32
    %c0_i32_0 = arith.constant 0 : i32
    %c0_i32_1 = arith.constant 0 : i32
    return %c0_i32, %c0_i32_0 : i32, i32
  }
  func.func @transform_2(%arg0: i32) -> (i32, i32) {
    %c0_i32 = arith.constant 0 : i32
    %c0_i32_0 = arith.constant 0 : i32
    %c0_i32_1 = arith.constant 0 : i32
    return %c0_i32, %c0_i32_0 : i32, i32
  }
  func.func @transform_3(%arg0: i32) -> (i32, i32) {
    %c0_i32 = arith.constant 0 : i32
    %c0_i32_0 = arith.constant 0 : i32
    %c0_i32_1 = arith.constant 0 : i32
    return %c0_i32, %c0_i32_0 : i32, i32
  }
  func.func @transform_4(%arg0: i32) -> (i32, i32) {
    %c0_i32 = arith.constant 0 : i32
    %c0_i32_0 = arith.constant 0 : i32
    %c0_i32_1 = arith.constant 0 : i32
    return %c0_i32, %c0_i32_0 : i32, i32
  }
  func.func @transform_5(%arg0: i32) -> (i32, i32) {
    %c0_i32 = arith.constant 0 : i32
    %c0_i32_0 = arith.constant 0 : i32
    %c0_i32_1 = arith.constant 0 : i32
    return %c0_i32, %c0_i32_0 : i32, i32
  }
  func.func @transform_6(%arg0: i32) -> (i32, i32) {
    %c0_i32 = arith.constant 0 : i32
    %c0_i32_0 = arith.constant 0 : i32
    %c0_i32_1 = arith.constant 0 : i32
    return %c0_i32, %c0_i32_0 : i32, i32
  }
  func.func @transform_7(%arg0: i32) -> (i32, i32, i32) {
    %c0_i32 = arith.constant 0 : i32
    %c0_i32_0 = arith.constant 0 : i32
    %c0_i32_1 = arith.constant 0 : i32
    return %arg0, %c0_i32, %c0_i32_0 : i32, i32, i32
  }
}

</mosaic_0001>

<llo_original>
// kernel: tpu_custom_call.1
$region0: #{tpu_custom_call.1}
  #allocation0 [shape = 'u32[]', space=smem, size = 0x4, offset = 0x4, fixed_abs, tag = 'smem constant byte address 0x4 - core index']
  #allocation1 [shape = 'u32[144,128]{1,0:T(1,128)}', space=vmem, size = 0x12000, scoped, tag = 'internal scratch']
  #allocation2 [shape = 'f32[64,128]{1,0:T(8,128)}', space=vmem, size = 0x8000, scoped, tag = 'scratch operand']
  #allocation3 [shape = 'f32[64,128]{1,0:T(8,128)}', space=vmem, size = 0x8000, scoped, tag = 'scratch operand']
  #allocation4 [shape = 'f32[64,128]{1,0:T(8,128)}', space=vmem, size = 0x8000, scoped, tag = 'scratch operand']
  #allocation5 [shape = 'f32[64,128]{1,0:T(8,128)}', space=vmem, size = 0x8000, scoped, tag = 'scratch operand']
  %s0 = inlined_call_operand.vmem [shape: f32[8,16,16], index: 0, kind: input, shape index: {}]
  %s1 = inlined_call_operand.vmem [shape: f32[32,16], index: 1, kind: input, shape index: {}]
  %s2 = inlined_call_operand.vmem [shape: f32[16,128], index: 2, kind: input, shape index: {}]
  %s3 = inlined_call_operand.vmem [shape: f32[16,128], index: 3, kind: input, shape index: {}]
  %s4 = inlined_call_operand.vmem [shape: f32[128,16], index: 4, kind: input, shape index: {}]
  %s5 = inlined_call_operand.vmem [shape: f32[128,16], index: 5, kind: input, shape index: {}]
  %s6 = inlined_call_operand.vmem [shape: f32[16,128], index: 6, kind: input, shape index: {}]
  %s7 = inlined_call_operand.hbm [shape: f32[8,16,16], index: 7, kind: output, shape index: {}]
  %s8 = sld [smem:[#allocation0]]
  $region61: #{tpu_custom_call.1} parent=0
    _
  %s10 = ssub.s32 1, %s8
  %s11 = scalar_select 0, %s10, %s8
  $region1: #{tpu_custom_call.1} parent=0
    #allocation6 [shape = 'u8[65536]{0}', space=vmem, size = 0x10000, scoped, tag = 'output window, operand 0']
    #allocation7 [shape = 's32[2]{0}', space=sflag, size = 0x8, scoped, tag = 'scoped memory for tpu_custom_call.1']
    %12 = vsyncpa [#allocation7], 0
    %s13 = scalar_lea.sflag [#allocation7], 1
    %14 = vsyncpa %s13, 0
    loop: start=0, step=1, limit=4
    $region2: #{tpu_custom_call.1} parent=1 // loop_pre_header
      _
    $region3: #{tpu_custom_call.1} parent=1 // loop_header
      %s16 = sphi 0, %s20
      %p17 = scmp.ge.s32.totalorder %s16, 4
      %s26 = sphi 0, %s28
      %s29 = sphi 0, %s26
      %s30 = sphi 0, %s29
      %s46 = sphi 0, %s30
      %s50 = sphi 0, %s50
      %s52 = sphi 0, %s50
      %s53 = sphi 0, %s52
      %s67 = sphi 0, %s53
      %s71 = sphi 0, %s71
      %s73 = sphi 0, %s71
      %s74 = sphi 0, %s73
      %s88 = sphi 0, %s74
      %s92 = sphi 0, %s92
      %s94 = sphi 0, %s92
      %s95 = sphi 0, %s94
      %s109 = sphi 0, %s95
      %s113 = sphi 0, %s113
      %s115 = sphi 0, %s113
      %s116 = sphi 0, %s115
      %s130 = sphi 0, %s116
      %s134 = sphi 0, %s134
      %s136 = sphi 0, %s134
      %s137 = sphi 0, %s136
      %s151 = sphi 0, %s137
      %s155 = sphi 0, %s155
      %s157 = sphi 0, %s155
      %s158 = sphi 0, %s157
      %s172 = sphi 0, %s158
      %s178 = sphi 0, %s180
      %s181 = sphi 0, %s178
      %s182 = sphi 0, %s181
      %s198 = sphi 0, %s182
    $region4: #{tpu_custom_call.1} parent=1 // loop_header_branch
      %19 = sbr.rel (%p17) target = $region8
    $region5: #{tpu_custom_call.1} parent=1 // loop_body
      %s21 = ssub.s32 %s16, 1
      %s22 = ssub.s32 %s16, 2
      %s23 = sadd.s32 %s16, 1
      %s24 = ssub.s32 %s16, %s23
      %p25 = scmp.eq.s32.totalorder %s24, 0
      %s27 = sadd.s32 %s26, 1
      %s28 = scalar_select %p25, %s26, %s27
      %p31 = pneg %p25
      %p32 = scmp.eq.s32.totalorder %s16, 1
      %p33 = por %p31, %p32
      %p34 = scmp.ne.s32.totalorder %s26, %s29
      %p35 = scmp.eq.s32.totalorder %s16, 0
      %p36 = por %p34, %p35
      %p37 = scmp.ne.s32.totalorder %s26, %s29
      %p38 = scmp.eq.s32.totalorder %s21, 1
      %p39 = por %p37, %p38
      %p40 = scmp.ne.s32.totalorder %s29, %s30
      %p41 = scmp.eq.s32.totalorder %s21, 0
      %p42 = por %p40, %p41
      %p43 = scmp.ne.s32.totalorder %s29, %s30
      %p44 = scmp.eq.s32.totalorder %s22, 1
      %p45 = por %p43, %p44
      %p47 = scmp.ne.s32.totalorder %s30, %s46
      %p48 = scmp.eq.s32.totalorder %s22, 0
      %p49 = por %p47, %p48
      %s51 = sadd.s32 %s50, 1
      %p54 = scmp.eq.s32.totalorder %s16, 1
      %p55 = scmp.ne.s32.totalorder %s50, %s52
      %p56 = scmp.eq.s32.totalorder %s16, 0
      %p57 = por %p55, %p56
      %p58 = scmp.ne.s32.totalorder %s50, %s52
      %p59 = scmp.eq.s32.totalorder %s21, 1
      %p60 = por %p58, %p59
      %p61 = scmp.ne.s32.totalorder %s52, %s53
      %p62 = scmp.eq.s32.totalorder %s21, 0
      %p63 = por %p61, %p62
      %p64 = scmp.ne.s32.totalorder %s52, %s53
      %p65 = scmp.eq.s32.totalorder %s22, 1
      %p66 = por %p64, %p65
      %p68 = scmp.ne.s32.totalorder %s53, %s67
      %p69 = scmp.eq.s32.totalorder %s22, 0
      %p70 = por %p68, %p69
      %s72 = sadd.s32 %s71, 1
      %p75 = scmp.eq.s32.totalorder %s16, 1
      %p76 = scmp.ne.s32.totalorder %s71, %s73
      %p77 = scmp.eq.s32.totalorder %s16, 0
      %p78 = por %p76, %p77
      %p79 = scmp.ne.s32.totalorder %s71, %s73
      %p80 = scmp.eq.s32.totalorder %s21, 1
      %p81 = por %p79, %p80
      %p82 = scmp.ne.s32.totalorder %s73, %s74
      %p83 = scmp.eq.s32.totalorder %s21, 0
      %p84 = por %p82, %p83
      %p85 = scmp.ne.s32.totalorder %s73, %s74
      %p86 = scmp.eq.s32.totalorder %s22, 1
      %p87 = por %p85, %p86
      %p89 = scmp.ne.s32.totalorder %s74, %s88
      %p90 = scmp.eq.s32.totalorder %s22, 0
      %p91 = por %p89, %p90
      %s93 = sadd.s32 %s92, 1
      %p96 = scmp.eq.s32.totalorder %s16, 1
      %p97 = scmp.ne.s32.totalorder %s92, %s94
      %p98 = scmp.eq.s32.totalorder %s16, 0
      %p99 = por %p97, %p98
      %p100 = scmp.ne.s32.totalorder %s92, %s94
      %p101 = scmp.eq.s32.totalorder %s21, 1
      %p102 = por %p100, %p101
      %p103 = scmp.ne.s32.totalorder %s94, %s95
      %p104 = scmp.eq.s32.totalorder %s21, 0
      %p105 = por %p103, %p104
      %p106 = scmp.ne.s32.totalorder %s94, %s95
      %p107 = scmp.eq.s32.totalorder %s22, 1
      %p108 = por %p106, %p107
      %p110 = scmp.ne.s32.totalorder %s95, %s109
      %p111 = scmp.eq.s32.totalorder %s22, 0
      %p112 = por %p110, %p111
      %s114 = sadd.s32 %s113, 1
      %p117 = scmp.eq.s32.totalorder %s16, 1
      %p118 = scmp.ne.s32.totalorder %s113, %s115
      %p119 = scmp.eq.s32.totalorder %s16, 0
      %p120 = por %p118, %p119
      %p121 = scmp.ne.s32.totalorder %s113, %s115
      %p122 = scmp.eq.s32.totalorder %s21, 1
      %p123 = por %p121, %p122
      %p124 = scmp.ne.s32.totalorder %s115, %s116
      %p125 = scmp.eq.s32.totalorder %s21, 0
      %p126 = por %p124, %p125
      %p127 = scmp.ne.s32.totalorder %s115, %s116
      %p128 = scmp.eq.s32.totalorder %s22, 1
      %p129 = por %p127, %p128
      %p131 = scmp.ne.s32.totalorder %s116, %s130
      %p132 = scmp.eq.s32.totalorder %s22, 0
      %p133 = por %p131, %p132
      %s135 = sadd.s32 %s134, 1
      %p138 = scmp.eq.s32.totalorder %s16, 1
      %p139 = scmp.ne.s32.totalorder %s134, %s136
      %p140 = scmp.eq.s32.totalorder %s16, 0
      %p141 = por %p139, %p140
      %p142 = scmp.ne.s32.totalorder %s134, %s136
      %p143 = scmp.eq.s32.totalorder %s21, 1
      %p144 = por %p142, %p143
      %p145 = scmp.ne.s32.totalorder %s136, %s137
      %p146 = scmp.eq.s32.totalorder %s21, 0
      %p147 = por %p145, %p146
      %p148 = scmp.ne.s32.totalorder %s136, %s137
      %p149 = scmp.eq.s32.totalorder %s22, 1
      %p150 = por %p148, %p149
      %p152 = scmp.ne.s32.totalorder %s137, %s151
      %p153 = scmp.eq.s32.totalorder %s22, 0
      %p154 = por %p152, %p153
      %s156 = sadd.s32 %s155, 1
      %p159 = scmp.eq.s32.totalorder %s16, 1
      %p160 = scmp.ne.s32.totalorder %s155, %s157
      %p161 = scmp.eq.s32.totalorder %s16, 0
      %p162 = por %p160, %p161
      %p163 = scmp.ne.s32.totalorder %s155, %s157
      %p164 = scmp.eq.s32.totalorder %s21, 1
      %p165 = por %p163, %p164
      %p166 = scmp.ne.s32.totalorder %s157, %s158
      %p167 = scmp.eq.s32.totalorder %s21, 0
      %p168 = por %p166, %p167
      %p169 = scmp.ne.s32.totalorder %s157, %s158
      %p170 = scmp.eq.s32.totalorder %s22, 1
      %p171 = por %p169, %p170
      %p173 = scmp.ne.s32.totalorder %s158, %s172
      %p174 = scmp.eq.s32.totalorder %s22, 0
      %p175 = por %p173, %p174
      %s176 = ssub.s32 %s16, %s23
      %p177 = scmp.eq.s32.totalorder %s176, 0
      %s179 = sadd.s32 %s178, 1
      %s180 = scalar_select %p177, %s178, %s179
      %p183 = pneg %p177
      %p184 = scmp.eq.s32.totalorder %s16, 1
      %p185 = por %p183, %p184
      %p186 = scmp.ne.s32.totalorder %s178, %s181
      %p187 = scmp.eq.s32.totalorder %s16, 0
      %p188 = por %p186, %p187
      %p189 = scmp.ne.s32.totalorder %s178, %s181
      %p190 = scmp.eq.s32.totalorder %s21, 1
      %p191 = por %p189, %p190
      %p192 = scmp.ne.s32.totalorder %s181, %s182
      %p193 = scmp.eq.s32.totalorder %s21, 0
      %p194 = por %p192, %p193
      %p195 = scmp.ne.s32.totalorder %s181, %s182
      %p196 = scmp.eq.s32.totalorder %s22, 1
      %p197 = por %p195, %p196
      %p199 = scmp.ne.s32.totalorder %s182, %s198
      %p200 = scmp.eq.s32.totalorder %s22, 0
      %p201 = por %p199, %p200
      %p202 = scmp.le.s32.totalorder 1, %s16
      %p203 = scmp.lt.s32.totalorder %s16, 3
      %p204 = pnand %p202, %p203
      %p205 = pneg %p204
      // Predicated region
      $region9: #{tpu_custom_call.1} parent=5 // pred_check
        _
      $region10: #{tpu_custom_call.1} parent=5 // pred_check_branch
        %207 = sbr.rel (%p204) target = $region12
      $region11: #{tpu_custom_call.1} parent=5 // pred_region
        %s208 = ssub.s32 %s16, 1
        // Predicated region
        $region13: #{tpu_custom_call.1} parent=11 // pred_check
          %p209 = pneg %p63
        $region14: #{tpu_custom_call.1} parent=11 // pred_check_branch
          %211 = sbr.rel (%p209) target = $region16
        $region15: #{tpu_custom_call.1} parent=11 // pred_region
          _
        $region16: #{tpu_custom_call.1} parent=11 // pred_fallthru
          _
        // Predicated region
        $region17: #{tpu_custom_call.1} parent=11 // pred_check
          %p212 = pneg %p84
        $region18: #{tpu_custom_call.1} parent=11 // pred_check_branch
          %214 = sbr.rel (%p212) target = $region20
        $region19: #{tpu_custom_call.1} parent=11 // pred_region
          _
        $region20: #{tpu_custom_call.1} parent=11 // pred_fallthru
          _
        // Predicated region
        $region21: #{tpu_custom_call.1} parent=11 // pred_check
          %p215 = pneg %p105
        $region22: #{tpu_custom_call.1} parent=11 // pred_check_branch
          %217 = sbr.rel (%p215) target = $region24
        $region23: #{tpu_custom_call.1} parent=11 // pred_region
          _
        $region24: #{tpu_custom_call.1} parent=11 // pred_fallthru
          _
        // Predicated region
        $region25: #{tpu_custom_call.1} parent=11 // pred_check
          %p218 = pneg %p126
        $region26: #{tpu_custom_call.1} parent=11 // pred_check_branch
          %220 = sbr.rel (%p218) target = $region28
        $region27: #{tpu_custom_call.1} parent=11 // pred_region
          _
        $region28: #{tpu_custom_call.1} parent=11 // pred_fallthru
          _
        // Predicated region
        $region29: #{tpu_custom_call.1} parent=11 // pred_check
          %p221 = pneg %p147
        $region30: #{tpu_custom_call.1} parent=11 // pred_check_branch
          %223 = sbr.rel (%p221) target = $region32
        $region31: #{tpu_custom_call.1} parent=11 // pred_region
          _
        $region32: #{tpu_custom_call.1} parent=11 // pred_fallthru
          _
        // Predicated region
        $region33: #{tpu_custom_call.1} parent=11 // pred_check
          %p224 = pneg %p168
        $region34: #{tpu_custom_call.1} parent=11 // pred_check_branch
          %226 = sbr.rel (%p224) target = $region36
        $region35: #{tpu_custom_call.1} parent=11 // pred_region
          _
        $region36: #{tpu_custom_call.1} parent=11 // pred_fallthru
          _
      $region12: #{tpu_custom_call.1} parent=5 // pred_fallthru
        _
      %p227 = scmp.lt.s32.totalorder %s16, 2
      // Predicated region
      $region37: #{tpu_custom_call.1} parent=5 // pred_check
        %p228 = pneg %p227
      $region38: #{tpu_custom_call.1} parent=5 // pred_check_branch
        %230 = sbr.rel (%p228) target = $region40
      $region39: #{tpu_custom_call.1} parent=5 // pred_region
        // Predicated region
        $region41: #{tpu_custom_call.1} parent=39 // pred_check
          %p231 = pneg %p36
        $region42: #{tpu_custom_call.1} parent=39 // pred_check_branch
          %233 = sbr.rel (%p231) target = $region44
        $region43: #{tpu_custom_call.1} parent=39 // pred_region
          %s234 = smul.u32 4, %s16
          %p235 = scmp.lt.s32.totalorder %s234, 7
          %s236 = scalar_select %p235, %s234, 7
          %s237 = smul.addr %s236, 2
          %s238 = smul.addr %s237, 8
          %s239 = scalar_lea.vmem %s0, %s238
          %s240 = smul.u32 4, %s16
        $region44: #{tpu_custom_call.1} parent=39 // pred_fallthru
          _
      $region40: #{tpu_custom_call.1} parent=5 // pred_fallthru
        _
      %p241 = scmp.le.s32.totalorder 1, %s16
      %p242 = scmp.lt.s32.totalorder %s16, 3
      %p243 = pnand %p241, %p242
      %p244 = pneg %p243
      // Predicated region
      $region45: #{tpu_custom_call.1} parent=5 // pred_check
        _
      $region46: #{tpu_custom_call.1} parent=5 // pred_check_branch
        %246 = sbr.rel (%p243) target = $region48
      $region47: #{tpu_custom_call.1} parent=5 // pred_region
        %s247 = ssub.s32 %s16, 1
        %s248 = smul.u32 4, %s21
        %p249 = scmp.lt.s32.totalorder %s248, 7
        %s250 = scalar_select %p249, %s248, 7
        %s251 = smul.addr %s250, 2
        %s252 = smul.addr %s251, 8
        %s253 = scalar_lea.vmem %s0, %s252
        %p254 = pneg %p42
        %p255 = pneg %p39
        %p256 = pneg %p63
        %p257 = pneg %p60
        %p258 = pneg %p84
        %p259 = pneg %p81
        %p260 = pneg %p105
        %p261 = pneg %p102
        %p262 = pneg %p126
        %p263 = pneg %p123
        %p264 = pneg %p147
        %p265 = pneg %p144
        %p266 = pneg %p168
        %p267 = pneg %p165
        %p268 = pneg %p194
        %p269 = pneg %p191
        %s270 = sand.u32 %s181, 1
        %s271 = scalar_lea.sflag [#allocation7], %s270
        %s272 = sand.u32 %s181, 1
        %s273 = smul.addr %s272, 64
        %s274 = scalar_lea.vmem [#allocation6], %s273
        %s275 = smul.u32 4, %s21
        %p276 = scmp.lt.s32.totalorder %s275, 7
        %s277 = scalar_select %p276, %s275, 7
        %s278 = smul.addr %s277, 2
        %s279 = smul.addr %s278, 8
        %s280 = scalar_lea.vmem %s0, %s279
        %s281 = smul.u32 4, %s21
        %s282 = smul.u32 4, %s21
        %v283 = vld [vmem:[%s280] sm:$0xff]
        %v284 = vld [vmem:[%s280 + $0x8] sm:$0xff]
        %v285 = vld [vmem:[%s280 + $0x10] sm:$0xff]
        %v286 = vld [vmem:[%s280 + $0x18] sm:$0xff]
        %v287 = vld [vmem:[%s280 + $0x20] sm:$0xff]
        %v288 = vld [vmem:[%s280 + $0x28] sm:$0xff]
        %v289 = vld [vmem:[%s280 + $0x30] sm:$0xff]
        %v290 = vld [vmem:[%s280 + $0x38] sm:$0xff]
        %v291 = vld [vmem:[%s1] sm:$0xff]
        %v292 = vld [vmem:[%s1 + $0x8] sm:$0xff]
        %v293 = vld [vmem:[%s1 + $0x10] sm:$0xff]
        %v294 = vld [vmem:[%s1 + $0x18] sm:$0xff]
        %v295 = vld [vmem:[%s6] sm:$0xff]
        %v296 = vld [vmem:[%s6 + $0x8] sm:$0xff]
        %v297 = vld [vmem:[%s2] sm:$0xff]
        %v298 = vld [vmem:[%s2 + $0x8] sm:$0xff]
        %vm299 = vcmask 130048
        %v301 = vsel %vm299, %v283, 0
        %v304 = vsel %vm299, %v284, 0
        %v307 = vsel %vm299, %v285, 0
        %v310 = vsel %vm299, %v286, 0
        %v313 = vsel %vm299, %v287, 0
        %v316 = vsel %vm299, %v288, 0
        %v319 = vsel %vm299, %v289, 0
        %v322 = vsel %vm299, %v290, 0
        %324 = vmatprep.subr.mxu0 0.0
        %325 = vmatpush1.msra.mxu0 %v297
        %326 = vmatprep.subr.mxu0 0.0
        %327 = vmatpush1.msra.mxu0 %v298
        %328 = vmatprep.subr.mxu0 0.0
        %329 = vmatpush1.msra.mxu0 0.0
        %330 = vmatprep.subr.mxu0 0.0
        %331 = vmatpush1.msra.mxu0 0.0
        %332 = vmatprep.subr.mxu0 0.0
        %333 = vmatpush1.msra.mxu0 0.0
        %334 = vmatprep.subr.mxu0 0.0
        %335 = vmatpush1.msra.mxu0 0.0
        %336 = vmatprep.subr.mxu0 0.0
        %337 = vmatpush1.msra.mxu0 0.0
        %338 = vmatprep.subr.mxu0 0.0
        %339 = vmatpush1.msra.mxu0 0.0
        %340 = vmatprep.subr.mxu0 0.0
        %341 = vmatpush1.msra.mxu0 0.0
        %342 = vmatprep.subr.mxu0 0.0
        %343 = vmatpush1.msra.mxu0 0.0
        %344 = vmatprep.subr.mxu0 0.0
        %345 = vmatpush1.msra.mxu0 0.0
        %346 = vmatprep.subr.mxu0 0.0
        %347 = vmatpush1.msra.mxu0 0.0
        %348 = vmatprep.subr.mxu0 0.0
        %349 = vmatpush1.msra.mxu0 0.0
        %350 = vmatprep.subr.mxu0 0.0
        %351 = vmatpush1.msra.mxu0 0.0
        %352 = vmatprep.subr.mxu0 0.0
        %353 = vmatpush1.msra.mxu0 0.0
        %354 = vmatprep.subr.mxu0 0.0
        %355 = vmatpush1.msra.mxu0 0.0
        %356 = vmatprep.subr.mxu0 0.0
        %357 = vmatpush1.msra.mxu0 0.0
        %358 = vmatprep.subr.mxu0 0.0
        %359 = vmatpush1.msra.mxu0 0.0
        %360 = vmatprep.subr.mxu0 0.0
        %361 = vmatpush1.msra.mxu0 0.0
        %362 = vmatprep.subr.mxu0 0.0
        %363 = vmatpush1.msra.mxu0 0.0
        %364 = vmatprep.subr.mxu0 0.0
        %365 = vmatpush1.msra.mxu0 0.0
        %366 = vmatprep.subr.mxu0 0.0
        %367 = vmatpush1.msra.mxu0 0.0
        %368 = vmatprep.subr.mxu0 0.0
        %369 = vmatpush1.msra.mxu0 0.0
        %370 = vmatprep.subr.mxu0 0.0
        %371 = vmatpush1.msra.mxu0 0.0
        %372 = vmatprep.subr.mxu0 0.0
        %373 = vmatpush1.msra.mxu0 0.0
        %374 = vmatprep.subr.mxu0 0.0
        %375 = vmatpush1.msra.mxu0 0.0
        %376 = vmatprep.subr.mxu0 0.0
        %377 = vmatpush1.msra.mxu0 0.0
        %378 = vmatprep.subr.mxu0 0.0
        %379 = vmatpush1.msra.mxu0 0.0
        %380 = vmatprep.subr.mxu0 0.0
        %381 = vmatpush1.msra.mxu0 0.0
        %382 = vmatprep.subr.mxu0 0.0
        %383 = vmatpush1.msra.mxu0 0.0
        %384 = vmatprep.subr.mxu0 0.0
        %385 = vmatpush1.msra.mxu0 0.0
        %386 = vmatprep.subr.mxu0 0.0
        %387 = vmatpush1.msra.mxu0 0.0
        %388 = vmatprep.mubr.f32.mxu0 0.0
        %389 = vmatmul.mubr.f32.gmra.mrb[0].mxu0 %v301
        %v390 = vpop.f32.mrb[0].mxu0
        %v391 = vadd.f32 0.0, %v390
        %v392 = vpop.f32.mrb[0].mxu0
        %393 = vmatprep.mubr.f32.mxu0 0.0
        %394 = vmatmul.mubr.f32.gmra.mrb[0].mxu0 %v304
        %v395 = vpop.f32.mrb[0].mxu0
        %v396 = vadd.f32 0.0, %v395
        %v397 = vpop.f32.mrb[0].mxu0
        %398 = vmatprep.mubr.f32.mxu0 0.0
        %399 = vmatmul.mubr.f32.gmra.mrb[0].mxu0 %v307
        %v400 = vpop.f32.mrb[0].mxu0
        %v401 = vadd.f32 0.0, %v400
        %v402 = vpop.f32.mrb[0].mxu0
        %403 = vmatprep.mubr.f32.mxu0 0.0
        %404 = vmatmul.mubr.f32.gmra.mrb[0].mxu0 %v310
        %v405 = vpop.f32.mrb[0].mxu0
        %v406 = vadd.f32 0.0, %v405
        %v407 = vpop.f32.mrb[0].mxu0
        %408 = vmatprep.mubr.f32.mxu0 0.0
        %409 = vmatmul.mubr.f32.gmra.mrb[0].mxu0 %v313
        %v410 = vpop.f32.mrb[0].mxu0
        %v411 = vadd.f32 0.0, %v410
        %v412 = vpop.f32.mrb[0].mxu0
        %413 = vmatprep.mubr.f32.mxu0 0.0
        %414 = vmatmul.mubr.f32.gmra.mrb[0].mxu0 %v316
        %v415 = vpop.f32.mrb[0].mxu0
        %v416 = vadd.f32 0.0, %v415
        %v417 = vpop.f32.mrb[0].mxu0
        %418 = vmatprep.mubr.f32.mxu0 0.0
        %419 = vmatmul.mubr.f32.gmra.mrb[0].mxu0 %v319
        %v420 = vpop.f32.mrb[0].mxu0
        %v421 = vadd.f32 0.0, %v420
        %v422 = vpop.f32.mrb[0].mxu0
        %423 = vmatprep.mubr.f32.mxu0 0.0
        %424 = vmatmul.mubr.f32.gmra.mrb[0].mxu0 %v322
        %v425 = vpop.f32.mrb[0].mxu0
        %v426 = vadd.f32 0.0, %v425
        %v427 = vpop.f32.mrb[0].mxu0
        %428 = vdwg.mxu0
        %429 = vst [vmem:[#allocation2] sm:$0xff] %v391
        %430 = vst [vmem:[#allocation2 + $0x8] sm:$0xff] %v396
        %431 = vst [vmem:[#allocation2 + $0x10] sm:$0xff] %v401
        %432 = vst [vmem:[#allocation2 + $0x18] sm:$0xff] %v406
        %433 = vst [vmem:[#allocation2 + $0x20] sm:$0xff] %v411
        %434 = vst [vmem:[#allocation2 + $0x28] sm:$0xff] %v416
        %435 = vst [vmem:[#allocation2 + $0x30] sm:$0xff] %v421
        %436 = vst [vmem:[#allocation2 + $0x38] sm:$0xff] %v426
        %v437 = vld [vmem:[%s3] sm:$0xff]
        %v438 = vld [vmem:[%s3 + $0x8] sm:$0xff]
        %439 = vmatprep.subr.mxu0 0.0
        %440 = vmatpush1.msra.mxu0 %v437
        %441 = vmatprep.subr.mxu0 0.0
        %442 = vmatpush1.msra.mxu0 %v438
        %443 = vmatprep.subr.mxu0 0.0
        %444 = vmatpush1.msra.mxu0 0.0
        %445 = vmatprep.subr.mxu0 0.0
        %446 = vmatpush1.msra.mxu0 0.0
        %447 = vmatprep.subr.mxu0 0.0
        %448 = vmatpush1.msra.mxu0 0.0
        %449 = vmatprep.subr.mxu0 0.0
        %450 = vmatpush1.msra.mxu0 0.0
        %451 = vmatprep.subr.mxu0 0.0
        %452 = vmatpush1.msra.mxu0 0.0
        %453 = vmatprep.subr.mxu0 0.0
        %454 = vmatpush1.msra.mxu0 0.0
        %455 = vmatprep.subr.mxu0 0.0
        %456 = vmatpush1.msra.mxu0 0.0
        %457 = vmatprep.subr.mxu0 0.0
        %458 = vmatpush1.msra.mxu0 0.0
        %459 = vmatprep.subr.mxu0 0.0
        %460 = vmatpush1.msra.mxu0 0.0
        %461 = vmatprep.subr.mxu0 0.0
        %462 = vmatpush1.msra.mxu0 0.0
        %463 = vmatprep.subr.mxu0 0.0
        %464 = vmatpush1.msra.mxu0 0.0
        %465 = vmatprep.subr.mxu0 0.0
        %466 = vmatpush1.msra.mxu0 0.0
        %467 = vmatprep.subr.mxu0 0.0
        %468 = vmatpush1.msra.mxu0 0.0
        %469 = vmatprep.subr.mxu0 0.0
        %470 = vmatpush1.msra.mxu0 0.0
        %471 = vmatprep.subr.mxu0 0.0
        %472 = vmatpush1.msra.mxu0 0.0
        %473 = vmatprep.subr.mxu0 0.0
        %474 = vmatpush1.msra.mxu0 0.0
        %475 = vmatprep.subr.mxu0 0.0
        %476 = vmatpush1.msra.mxu0 0.0
        %477 = vmatprep.subr.mxu0 0.0
        %478 = vmatpush1.msra.mxu0 0.0
        %479 = vmatprep.subr.mxu0 0.0
        %480 = vmatpush1.msra.mxu0 0.0
        %481 = vmatprep.subr.mxu0 0.0
        %482 = vmatpush1.msra.mxu0 0.0
        %483 = vmatprep.subr.mxu0 0.0
        %484 = vmatpush1.msra.mxu0 0.0
        %485 = vmatprep.subr.mxu0 0.0
        %486 = vmatpush1.msra.mxu0 0.0
        %487 = vmatprep.subr.mxu0 0.0
        %488 = vmatpush1.msra.mxu0 0.0
        %489 = vmatprep.subr.mxu0 0.0
        %490 = vmatpush1.msra.mxu0 0.0
        %491 = vmatprep.subr.mxu0 0.0
        %492 = vmatpush1.msra.mxu0 0.0
        %493 = vmatprep.subr.mxu0 0.0
        %494 = vmatpush1.msra.mxu0 0.0
        %495 = vmatprep.subr.mxu0 0.0
        %496 = vmatpush1.msra.mxu0 0.0
        %497 = vmatprep.subr.mxu0 0.0
        %498 = vmatpush1.msra.mxu0 0.0
        %499 = vmatprep.subr.mxu0 0.0
        %500 = vmatpush1.msra.mxu0 0.0
        %501 = vmatprep.subr.mxu0 0.0
        %502 = vmatpush1.msra.mxu0 0.0
        %503 = vmatprep.mubr.f32.mxu0 0.0
        %504 = vmatmul.mubr.f32.gmra.mrb[0].mxu0 %v301
        %v505 = vpop.f32.mrb[0].mxu0
        %v506 = vadd.f32 0.0, %v505
        %v507 = vpop.f32.mrb[0].mxu0
        %508 = vmatprep.mubr.f32.mxu0 0.0
        %509 = vmatmul.mubr.f32.gmra.mrb[0].mxu0 %v304
        %v510 = vpop.f32.mrb[0].mxu0
        %v511 = vadd.f32 0.0, %v510
        %v512 = vpop.f32.mrb[0].mxu0
        %513 = vmatprep.mubr.f32.mxu0 0.0
        %514 = vmatmul.mubr.f32.gmra.mrb[0].mxu0 %v307
        %v515 = vpop.f32.mrb[0].mxu0
        %v516 = vadd.f32 0.0, %v515
        %v517 = vpop.f32.mrb[0].mxu0
        %518 = vmatprep.mubr.f32.mxu0 0.0
        %519 = vmatmul.mubr.f32.gmra.mrb[0].mxu0 %v310
        %v520 = vpop.f32.mrb[0].mxu0
        %v521 = vadd.f32 0.0, %v520
        %v522 = vpop.f32.mrb[0].mxu0
        %523 = vmatprep.mubr.f32.mxu0 0.0
        %524 = vmatmul.mubr.f32.gmra.mrb[0].mxu0 %v313
        %v525 = vpop.f32.mrb[0].mxu0
        %v526 = vadd.f32 0.0, %v525
        %v527 = vpop.f32.mrb[0].mxu0
        %528 = vmatprep.mubr.f32.mxu0 0.0
        %529 = vmatmul.mubr.f32.gmra.mrb[0].mxu0 %v316
        %v530 = vpop.f32.mrb[0].mxu0
        %v531 = vadd.f32 0.0, %v530
        %v532 = vpop.f32.mrb[0].mxu0
        %533 = vmatprep.mubr.f32.mxu0 0.0
        %534 = vmatmul.mubr.f32.gmra.mrb[0].mxu0 %v319
        %v535 = vpop.f32.mrb[0].mxu0
        %v536 = vadd.f32 0.0, %v535
        %v537 = vpop.f32.mrb[0].mxu0
        %538 = vmatprep.mubr.f32.mxu0 0.0
        %539 = vmatmul.mubr.f32.gmra.mrb[0].mxu0 %v322
        %v540 = vpop.f32.mrb[0].mxu0
        %v541 = vadd.f32 0.0, %v540
        %v542 = vpop.f32.mrb[0].mxu0
        %543 = vdwg.mxu0
        %544 = vst [vmem:[#allocation3] sm:$0xff] %v506
        %545 = vst [vmem:[#allocation3 + $0x8] sm:$0xff] %v511
        %546 = vst [vmem:[#allocation3 + $0x10] sm:$0xff] %v516
        %547 = vst [vmem:[#allocation3 + $0x18] sm:$0xff] %v521
        %548 = vst [vmem:[#allocation3 + $0x20] sm:$0xff] %v526
        %549 = vst [vmem:[#allocation3 + $0x28] sm:$0xff] %v531
        %550 = vst [vmem:[#allocation3 + $0x30] sm:$0xff] %v536
        %551 = vst [vmem:[#allocation3 + $0x38] sm:$0xff] %v541
        %v552 = vld [vmem:[#allocation2] sm:$0xff]
        %v553 = vld [vmem:[#allocation2 + $0x8] sm:$0xff]
        %v554 = vld [vmem:[#allocation3] sm:$0xff]
        %v555 = vld [vmem:[#allocation3 + $0x8] sm:$0xff]
        %v557 = vsel %vm299, %v291, 0
        %v560 = vsel %vm299, %v292, 0
        %v563 = vsel %vm299, %v293, 0
        %v566 = vsel %vm299, %v294, 0
        %568 = vmatprep.subr.mxu0 0.0
        %569 = vmatpush1.msra.mxu0 %v552
        %570 = vmatprep.subr.mxu0 0.0
        %571 = vmatpush1.msra.mxu0 %v553
        %572 = vmatprep.subr.mxu0 0.0
        %573 = vmatpush1.msra.mxu0 0.0
        %574 = vmatprep.subr.mxu0 0.0
        %575 = vmatpush1.msra.mxu0 0.0
        %576 = vmatprep.subr.mxu0 0.0
        %577 = vmatpush1.msra.mxu0 0.0
        %578 = vmatprep.subr.mxu0 0.0
        %579 = vmatpush1.msra.mxu0 0.0
        %580 = vmatprep.subr.mxu0 0.0
        %581 = vmatpush1.msra.mxu0 0.0
        %582 = vmatprep.subr.mxu0 0.0
        %583 = vmatpush1.msra.mxu0 0.0
        %584 = vmatprep.subr.mxu0 0.0
        %585 = vmatpush1.msra.mxu0 0.0
        %586 = vmatprep.subr.mxu0 0.0
        %587 = vmatpush1.msra.mxu0 0.0
        %588 = vmatprep.subr.mxu0 0.0
        %589 = vmatpush1.msra.mxu0 0.0
        %590 = vmatprep.subr.mxu0 0.0
        %591 = vmatpush1.msra.mxu0 0.0
        %592 = vmatprep.subr.mxu0 0.0
        %593 = vmatpush1.msra.mxu0 0.0
        %594 = vmatprep.subr.mxu0 0.0
        %595 = vmatpush1.msra.mxu0 0.0
        %596 = vmatprep.subr.mxu0 0.0
        %597 = vmatpush1.msra.mxu0 0.0
        %598 = vmatprep.subr.mxu0 0.0
        %599 = vmatpush1.msra.mxu0 0.0
        %600 = vmatprep.subr.mxu0 0.0
        %601 = vmatpush1.msra.mxu0 0.0
        %602 = vmatprep.subr.mxu0 0.0
        %603 = vmatpush1.msra.mxu0 0.0
        %604 = vmatprep.subr.mxu0 0.0
        %605 = vmatpush1.msra.mxu0 0.0
        %606 = vmatprep.subr.mxu0 0.0
        %607 = vmatpush1.msra.mxu0 0.0
        %608 = vmatprep.subr.mxu0 0.0
        %609 = vmatpush1.msra.mxu0 0.0
        %610 = vmatprep.subr.mxu0 0.0
        %611 = vmatpush1.msra.mxu0 0.0
        %612 = vmatprep.subr.mxu0 0.0
        %613 = vmatpush1.msra.mxu0 0.0
        %614 = vmatprep.subr.mxu0 0.0
        %615 = vmatpush1.msra.mxu0 0.0
        %616 = vmatprep.subr.mxu0 0.0
        %617 = vmatpush1.msra.mxu0 0.0
        %618 = vmatprep.subr.mxu0 0.0
        %619 = vmatpush1.msra.mxu0 0.0
        %620 = vmatprep.subr.mxu0 0.0
        %621 = vmatpush1.msra.mxu0 0.0
        %622 = vmatprep.subr.mxu0 0.0
        %623 = vmatpush1.msra.mxu0 0.0
        %624 = vmatprep.subr.mxu0 0.0
        %625 = vmatpush1.msra.mxu0 0.0
        %626 = vmatprep.subr.mxu0 0.0
        %627 = vmatpush1.msra.mxu0 0.0
        %628 = vmatprep.subr.mxu0 0.0
        %629 = vmatpush1.msra.mxu0 0.0
        %630 = vmatprep.subr.mxu0 0.0
        %631 = vmatpush1.msra.mxu0 0.0
        %632 = vmatprep.mubr.f32.mxu0 0.0
        %633 = vmatmul.mubr.f32.gmra.mrb[0].mxu0 %v557
        %v634 = vpop.f32.mrb[0].mxu0
        %v635 = vadd.f32 0.0, %v634
        %v636 = vpop.f32.mrb[0].mxu0
        %637 = vmatprep.mubr.f32.mxu0 0.0
        %638 = vmatmul.mubr.f32.gmra.mrb[0].mxu0 %v560
        %v639 = vpop.f32.mrb[0].mxu0
        %v640 = vadd.f32 0.0, %v639
        %v641 = vpop.f32.mrb[0].mxu0
        %642 = vmatprep.mubr.f32.mxu0 0.0
        %643 = vmatmul.mubr.f32.gmra.mrb[0].mxu0 %v563
        %v644 = vpop.f32.mrb[0].mxu0
        %v645 = vadd.f32 0.0, %v644
        %v646 = vpop.f32.mrb[0].mxu0
        %647 = vmatprep.mubr.f32.mxu0 0.0
        %648 = vmatmul.mubr.f32.gmra.mrb[0].mxu0 %v566
        %v649 = vpop.f32.mrb[0].mxu0
        %v650 = vadd.f32 0.0, %v649
        %v651 = vpop.f32.mrb[0].mxu0
        %652 = vdwg.mxu0
        %653 = vmatprep.subr.mxu0 0.0
        %654 = vmatpush1.msra.mxu0 %v554
        %655 = vmatprep.subr.mxu0 0.0
        %656 = vmatpush1.msra.mxu0 %v555
        %657 = vmatprep.subr.mxu0 0.0
        %658 = vmatpush1.msra.mxu0 0.0
        %659 = vmatprep.subr.mxu0 0.0
        %660 = vmatpush1.msra.mxu0 0.0
        %661 = vmatprep.subr.mxu0 0.0
        %662 = vmatpush1.msra.mxu0 0.0
        %663 = vmatprep.subr.mxu0 0.0
        %664 = vmatpush1.msra.mxu0 0.0
        %665 = vmatprep.subr.mxu0 0.0
        %666 = vmatpush1.msra.mxu0 0.0
        %667 = vmatprep.subr.mxu0 0.0
        %668 = vmatpush1.msra.mxu0 0.0
        %669 = vmatprep.subr.mxu0 0.0
        %670 = vmatpush1.msra.mxu0 0.0
        %671 = vmatprep.subr.mxu0 0.0
        %672 = vmatpush1.msra.mxu0 0.0
        %673 = vmatprep.subr.mxu0 0.0
        %674 = vmatpush1.msra.mxu0 0.0
        %675 = vmatprep.subr.mxu0 0.0
        %676 = vmatpush1.msra.mxu0 0.0
        %677 = vmatprep.subr.mxu0 0.0
        %678 = vmatpush1.msra.mxu0 0.0
        %679 = vmatprep.subr.mxu0 0.0
        %680 = vmatpush1.msra.mxu0 0.0
        %681 = vmatprep.subr.mxu0 0.0
        %682 = vmatpush1.msra.mxu0 0.0
        %683 = vmatprep.subr.mxu0 0.0
        %684 = vmatpush1.msra.mxu0 0.0
        %685 = vmatprep.subr.mxu0 0.0
        %686 = vmatpush1.msra.mxu0 0.0
        %687 = vmatprep.subr.mxu0 0.0
        %688 = vmatpush1.msra.mxu0 0.0
        %689 = vmatprep.subr.mxu0 0.0
        %690 = vmatpush1.msra.mxu0 0.0
        %691 = vmatprep.subr.mxu0 0.0
        %692 = vmatpush1.msra.mxu0 0.0
        %693 = vmatprep.subr.mxu0 0.0
        %694 = vmatpush1.msra.mxu0 0.0
        %695 = vmatprep.subr.mxu0 0.0
        %696 = vmatpush1.msra.mxu0 0.0
        %697 = vmatprep.subr.mxu0 0.0
        %698 = vmatpush1.msra.mxu0 0.0
        %699 = vmatprep.subr.mxu0 0.0
        %700 = vmatpush1.msra.mxu0 0.0
        %701 = vmatprep.subr.mxu0 0.0
        %702 = vmatpush1.msra.mxu0 0.0
        %703 = vmatprep.subr.mxu0 0.0
        %704 = vmatpush1.msra.mxu0 0.0
        %705 = vmatprep.subr.mxu0 0.0
        %706 = vmatpush1.msra.mxu0 0.0
        %707 = vmatprep.subr.mxu0 0.0
        %708 = vmatpush1.msra.mxu0 0.0
        %709 = vmatprep.subr.mxu0 0.0
        %710 = vmatpush1.msra.mxu0 0.0
        %711 = vmatprep.subr.mxu0 0.0
        %712 = vmatpush1.msra.mxu0 0.0
        %713 = vmatprep.subr.mxu0 0.0
        %714 = vmatpush1.msra.mxu0 0.0
        %715 = vmatprep.subr.mxu0 0.0
        %716 = vmatpush1.msra.mxu0 0.0
        %717 = vmatprep.mubr.f32.mxu0 0.0
        %718 = vmatmul.mubr.f32.gmra.mrb[0].mxu0 %v557
        %v719 = vpop.f32.mrb[0].mxu0
        %v720 = vadd.f32 0.0, %v719
        %v721 = vpop.f32.mrb[0].mxu0
        %722 = vmatprep.mubr.f32.mxu0 0.0
        %723 = vmatmul.mubr.f32.gmra.mrb[0].mxu0 %v560
        %v724 = vpop.f32.mrb[0].mxu0
        %v725 = vadd.f32 0.0, %v724
        %v726 = vpop.f32.mrb[0].mxu0
        %727 = vmatprep.mubr.f32.mxu0 0.0
        %728 = vmatmul.mubr.f32.gmra.mrb[0].mxu0 %v563
        %v729 = vpop.f32.mrb[0].mxu0
        %v730 = vadd.f32 0.0, %v729
        %v731 = vpop.f32.mrb[0].mxu0
        %732 = vmatprep.mubr.f32.mxu0 0.0
        %733 = vmatmul.mubr.f32.gmra.mrb[0].mxu0 %v566
        %v734 = vpop.f32.mrb[0].mxu0
        %v735 = vadd.f32 0.0, %v734
        %v736 = vpop.f32.mrb[0].mxu0
        %737 = vdwg.mxu0
        %v738 = vsub.f32 %v635, %v730
        %v739 = vsub.f32 %v640, %v735
        %v740 = vmul.f32 %v295, %v738
        %v741 = vmul.f32 %v296, %v739
        %v742 = vadd.f32 %v720, %v645
        %v743 = vadd.f32 %v725, %v650
        %v744 = vmul.f32 %v295, %v742
        %v745 = vmul.f32 %v296, %v743
        %v746 = vsub.f32 0.0, %v744
        %v747 = vsub.f32 0.0, %v745
        %748 = vmatprep.subr.mxu0 0.0
        %749 = vmatpush1.msra.mxu0 %v740
        %750 = vmatprep.subr.mxu0 0.0
        %751 = vmatpush1.msra.mxu0 %v741
        %752 = vmatprep.subr.mxu0 0.0
        %753 = vmatpush1.msra.mxu0 0.0
        %754 = vmatprep.subr.mxu0 0.0
        %755 = vmatpush1.msra.mxu0 0.0
        %756 = vmatprep.subr.mxu0 0.0
        %757 = vmatpush1.msra.mxu0 0.0
        %758 = vmatprep.subr.mxu0 0.0
        %759 = vmatpush1.msra.mxu0 0.0
        %760 = vmatprep.subr.mxu0 0.0
        %761 = vmatpush1.msra.mxu0 0.0
        %762 = vmatprep.subr.mxu0 0.0
        %763 = vmatpush1.msra.mxu0 0.0
        %764 = vmatprep.subr.mxu0 0.0
        %765 = vmatpush1.msra.mxu0 0.0
        %766 = vmatprep.subr.mxu0 0.0
        %767 = vmatpush1.msra.mxu0 0.0
        %768 = vmatprep.subr.mxu0 0.0
        %769 = vmatpush1.msra.mxu0 0.0
        %770 = vmatprep.subr.mxu0 0.0
        %771 = vmatpush1.msra.mxu0 0.0
        %772 = vmatprep.subr.mxu0 0.0
        %773 = vmatpush1.msra.mxu0 0.0
        %774 = vmatprep.subr.mxu0 0.0
        %775 = vmatpush1.msra.mxu0 0.0
        %776 = vmatprep.subr.mxu0 0.0
        %777 = vmatpush1.msra.mxu0 0.0
        %778 = vmatprep.subr.mxu0 0.0
        %779 = vmatpush1.msra.mxu0 0.0
        %780 = vmatprep.subr.mxu0 0.0
        %781 = vmatpush1.msra.mxu0 0.0
        %782 = vmatprep.subr.mxu0 0.0
        %783 = vmatpush1.msra.mxu0 0.0
        %784 = vmatprep.subr.mxu0 0.0
        %785 = vmatpush1.msra.mxu0 0.0
        %786 = vmatprep.subr.mxu0 0.0
        %787 = vmatpush1.msra.mxu0 0.0
        %788 = vmatprep.subr.mxu0 0.0
        %789 = vmatpush1.msra.mxu0 0.0
        %790 = vmatprep.subr.mxu0 0.0
        %791 = vmatpush1.msra.mxu0 0.0
        %792 = vmatprep.subr.mxu0 0.0
        %793 = vmatpush1.msra.mxu0 0.0
        %794 = vmatprep.subr.mxu0 0.0
        %795 = vmatpush1.msra.mxu0 0.0
        %796 = vmatprep.subr.mxu0 0.0
        %797 = vmatpush1.msra.mxu0 0.0
        %798 = vmatprep.subr.mxu0 0.0
        %799 = vmatpush1.msra.mxu0 0.0
        %800 = vmatprep.subr.mxu0 0.0
        %801 = vmatpush1.msra.mxu0 0.0
        %802 = vmatprep.subr.mxu0 0.0
        %803 = vmatpush1.msra.mxu0 0.0
        %804 = vmatprep.subr.mxu0 0.0
        %805 = vmatpush1.msra.mxu0 0.0
        %806 = vmatprep.subr.mxu0 0.0
        %807 = vmatpush1.msra.mxu0 0.0
        %808 = vmatprep.subr.mxu0 0.0
        %809 = vmatpush1.msra.mxu0 0.0
        %810 = vmatprep.subr.mxu0 0.0
        %811 = vmatpush1.msra.mxu0 0.0
        %812 = vmatprep.mubr.f32.mxu0 0.0
        %813 = vmatmul.mubr.f32.gmra.mrb[0].mxu0 %v557
        %v814 = vpop.f32.mrb[0].mxu0
        %v815 = vadd.f32 0.0, %v814
        %v816 = vpop.f32.mrb[0].mxu0
        %817 = vmatprep.mubr.f32.mxu0 0.0
        %818 = vmatmul.mubr.f32.gmra.mrb[0].mxu0 %v560
        %v819 = vpop.f32.mrb[0].mxu0
        %v820 = vadd.f32 0.0, %v819
        %v821 = vpop.f32.mrb[0].mxu0
        %822 = vmatprep.mubr.f32.mxu0 0.0
        %823 = vmatmul.mubr.f32.gmra.mrb[0].mxu0 %v563
        %v824 = vpop.f32.mrb[0].mxu0
        %v825 = vadd.f32 0.0, %v824
        %v826 = vpop.f32.mrb[0].mxu0
        %827 = vmatprep.mubr.f32.mxu0 0.0
        %828 = vmatmul.mubr.f32.gmra.mrb[0].mxu0 %v566
        %v829 = vpop.f32.mrb[0].mxu0
        %v830 = vadd.f32 0.0, %v829
        %v831 = vpop.f32.mrb[0].mxu0
        %832 = vdwg.mxu0
        %833 = vmatprep.subr.mxu0 0.0
        %834 = vmatpush1.msra.mxu0 %v746
        %835 = vmatprep.subr.mxu0 0.0
        %836 = vmatpush1.msra.mxu0 %v747
        %837 = vmatprep.subr.mxu0 0.0
        %838 = vmatpush1.msra.mxu0 0.0
        %839 = vmatprep.subr.mxu0 0.0
        %840 = vmatpush1.msra.mxu0 0.0
        %841 = vmatprep.subr.mxu0 0.0
        %842 = vmatpush1.msra.mxu0 0.0
        %843 = vmatprep.subr.mxu0 0.0
        %844 = vmatpush1.msra.mxu0 0.0
        %845 = vmatprep.subr.mxu0 0.0
        %846 = vmatpush1.msra.mxu0 0.0
        %847 = vmatprep.subr.mxu0 0.0
        %848 = vmatpush1.msra.mxu0 0.0
        %849 = vmatprep.subr.mxu0 0.0
        %850 = vmatpush1.msra.mxu0 0.0
        %851 = vmatprep.subr.mxu0 0.0
        %852 = vmatpush1.msra.mxu0 0.0
        %853 = vmatprep.subr.mxu0 0.0
        %854 = vmatpush1.msra.mxu0 0.0
        %855 = vmatprep.subr.mxu0 0.0
        %856 = vmatpush1.msra.mxu0 0.0
        %857 = vmatprep.subr.mxu0 0.0
        %858 = vmatpush1.msra.mxu0 0.0
        %859 = vmatprep.subr.mxu0 0.0
        %860 = vmatpush1.msra.mxu0 0.0
        %861 = vmatprep.subr.mxu0 0.0
        %862 = vmatpush1.msra.mxu0 0.0
        %863 = vmatprep.subr.mxu0 0.0
        %864 = vmatpush1.msra.mxu0 0.0
        %865 = vmatprep.subr.mxu0 0.0
        %866 = vmatpush1.msra.mxu0 0.0
        %867 = vmatprep.subr.mxu0 0.0
        %868 = vmatpush1.msra.mxu0 0.0
        %869 = vmatprep.subr.mxu0 0.0
        %870 = vmatpush1.msra.mxu0 0.0
        %871 = vmatprep.subr.mxu0 0.0
        %872 = vmatpush1.msra.mxu0 0.0
        %873 = vmatprep.subr.mxu0 0.0
        %874 = vmatpush1.msra.mxu0 0.0
        %875 = vmatprep.subr.mxu0 0.0
        %876 = vmatpush1.msra.mxu0 0.0
        %877 = vmatprep.subr.mxu0 0.0
        %878 = vmatpush1.msra.mxu0 0.0
        %879 = vmatprep.subr.mxu0 0.0
        %880 = vmatpush1.msra.mxu0 0.0
        %881 = vmatprep.subr.mxu0 0.0
        %882 = vmatpush1.msra.mxu0 0.0
        %883 = vmatprep.subr.mxu0 0.0
        %884 = vmatpush1.msra.mxu0 0.0
        %885 = vmatprep.subr.mxu0 0.0
        %886 = vmatpush1.msra.mxu0 0.0
        %887 = vmatprep.subr.mxu0 0.0
        %888 = vmatpush1.msra.mxu0 0.0
        %889 = vmatprep.subr.mxu0 0.0
        %890 = vmatpush1.msra.mxu0 0.0
        %891 = vmatprep.subr.mxu0 0.0
        %892 = vmatpush1.msra.mxu0 0.0
        %893 = vmatprep.subr.mxu0 0.0
        %894 = vmatpush1.msra.mxu0 0.0
        %895 = vmatprep.subr.mxu0 0.0
        %896 = vmatpush1.msra.mxu0 0.0
        %897 = vmatprep.mubr.f32.mxu0 0.0
        %898 = vmatmul.mubr.f32.gmra.mrb[0].mxu0 %v557
        %v899 = vpop.f32.mrb[0].mxu0
        %v900 = vadd.f32 0.0, %v899
        %v901 = vpop.f32.mrb[0].mxu0
        %902 = vmatprep.mubr.f32.mxu0 0.0
        %903 = vmatmul.mubr.f32.gmra.mrb[0].mxu0 %v560
        %v904 = vpop.f32.mrb[0].mxu0
        %v905 = vadd.f32 0.0, %v904
        %v906 = vpop.f32.mrb[0].mxu0
        %907 = vmatprep.mubr.f32.mxu0 0.0
        %908 = vmatmul.mubr.f32.gmra.mrb[0].mxu0 %v563
        %v909 = vpop.f32.mrb[0].mxu0
        %v910 = vadd.f32 0.0, %v909
        %v911 = vpop.f32.mrb[0].mxu0
        %912 = vmatprep.mubr.f32.mxu0 0.0
        %913 = vmatmul.mubr.f32.gmra.mrb[0].mxu0 %v566
        %v914 = vpop.f32.mrb[0].mxu0
        %v915 = vadd.f32 0.0, %v914
        %v916 = vpop.f32.mrb[0].mxu0
        %917 = vdwg.mxu0
        %v918 = vsub.f32 %v815, %v910
        %v919 = vsub.f32 %v820, %v915
        %920 = vst [vmem:[#allocation4] sm:$0xff] %v918
        %921 = vst [vmem:[#allocation4 + $0x8] sm:$0xff] %v919
        %v922 = vadd.f32 %v900, %v825
        %v923 = vadd.f32 %v905, %v830
        %924 = vst [vmem:[#allocation5] sm:$0xff] %v922
        %925 = vst [vmem:[#allocation5 + $0x8] sm:$0xff] %v923
        %v926 = vld [vmem:[#allocation2 + $0x10] sm:$0xff]
        %v927 = vld [vmem:[#allocation2 + $0x18] sm:$0xff]
        %v928 = vld [vmem:[#allocation3 + $0x10] sm:$0xff]
        %v929 = vld [vmem:[#allocation3 + $0x18] sm:$0xff]
        %930 = vmatprep.subr.mxu0 0.0
        %931 = vmatpush1.msra.mxu0 %v926
        %932 = vmatprep.subr.mxu0 0.0
        %933 = vmatpush1.msra.mxu0 %v927
        %934 = vmatprep.subr.mxu0 0.0
        %935 = vmatpush1.msra.mxu0 0.0
        %936 = vmatprep.subr.mxu0 0.0
        %937 = vmatpush1.msra.mxu0 0.0
        %938 = vmatprep.subr.mxu0 0.0
        %939 = vmatpush1.msra.mxu0 0.0
        %940 = vmatprep.subr.mxu0 0.0
        %941 = vmatpush1.msra.mxu0 0.0
        %942 = vmatprep.subr.mxu0 0.0
        %943 = vmatpush1.msra.mxu0 0.0
        %944 = vmatprep.subr.mxu0 0.0
        %945 = vmatpush1.msra.mxu0 0.0
        %946 = vmatprep.subr.mxu0 0.0
        %947 = vmatpush1.msra.mxu0 0.0
        %948 = vmatprep.subr.mxu0 0.0
        %949 = vmatpush1.msra.mxu0 0.0
        %950 = vmatprep.subr.mxu0 0.0
        %951 = vmatpush1.msra.mxu0 0.0
        %952 = vmatprep.subr.mxu0 0.0
        %953 = vmatpush1.msra.mxu0 0.0
        %954 = vmatprep.subr.mxu0 0.0
        %955 = vmatpush1.msra.mxu0 0.0
        %956 = vmatprep.subr.mxu0 0.0
        %957 = vmatpush1.msra.mxu0 0.0
        %958 = vmatprep.subr.mxu0 0.0
        %959 = vmatpush1.msra.mxu0 0.0
        %960 = vmatprep.subr.mxu0 0.0
        %961 = vmatpush1.msra.mxu0 0.0
        %962 = vmatprep.subr.mxu0 0.0
        %963 = vmatpush1.msra.mxu0 0.0
        %964 = vmatprep.subr.mxu0 0.0
        %965 = vmatpush1.msra.mxu0 0.0
        %966 = vmatprep.subr.mxu0 0.0
        %967 = vmatpush1.msra.mxu0 0.0
        %968 = vmatprep.subr.mxu0 0.0
        %969 = vmatpush1.msra.mxu0 0.0
        %970 = vmatprep.subr.mxu0 0.0
        %971 = vmatpush1.msra.mxu0 0.0
        %972 = vmatprep.subr.mxu0 0.0
        %973 = vmatpush1.msra.mxu0 0.0
        %974 = vmatprep.subr.mxu0 0.0
        %975 = vmatpush1.msra.mxu0 0.0
        %976 = vmatprep.subr.mxu0 0.0
        %977 = vmatpush1.msra.mxu0 0.0
        %978 = vmatprep.subr.mxu0 0.0
        %979 = vmatpush1.msra.mxu0 0.0
        %980 = vmatprep.subr.mxu0 0.0
        %981 = vmatpush1.msra.mxu0 0.0
        %982 = vmatprep.subr.mxu0 0.0
        %983 = vmatpush1.msra.mxu0 0.0
        %984 = vmatprep.subr.mxu0 0.0
        %985 = vmatpush1.msra.mxu0 0.0
        %986 = vmatprep.subr.mxu0 0.0
        %987 = vmatpush1.msra.mxu0 0.0
        %988 = vmatprep.subr.mxu0 0.0
        %989 = vmatpush1.msra.mxu0 0.0
        %990 = vmatprep.subr.mxu0 0.0
        %991 = vmatpush1.msra.mxu0 0.0
        %992 = vmatprep.subr.mxu0 0.0
        %993 = vmatpush1.msra.mxu0 0.0
        %994 = vmatprep.mubr.f32.mxu0 0.0
        %995 = vmatmul.mubr.f32.gmra.mrb[0].mxu0 %v557
        %v996 = vpop.f32.mrb[0].mxu0
        %v997 = vadd.f32 0.0, %v996
        %v998 = vpop.f32.mrb[0].mxu0
        %999 = vmatprep.mubr.f32.mxu0 0.0
        %1000 = vmatmul.mubr.f32.gmra.mrb[0].mxu0 %v560
        %v1001 = vpop.f32.mrb[0].mxu0
        %v1002 = vadd.f32 0.0, %v1001
        %v1003 = vpop.f32.mrb[0].mxu0
        %1004 = vmatprep.mubr.f32.mxu0 0.0
        %1005 = vmatmul.mubr.f32.gmra.mrb[0].mxu0 %v563
        %v1006 = vpop.f32.mrb[0].mxu0
        %v1007 = vadd.f32 0.0, %v1006
        %v1008 = vpop.f32.mrb[0].mxu0
        %1009 = vmatprep.mubr.f32.mxu0 0.0
        %1010 = vmatmul.mubr.f32.gmra.mrb[0].mxu0 %v566
        %v1011 = vpop.f32.mrb[0].mxu0
        %v1012 = vadd.f32 0.0, %v1011
        %v1013 = vpop.f32.mrb[0].mxu0
        %1014 = vdwg.mxu0
        %1015 = vmatprep.subr.mxu0 0.0
        %1016 = vmatpush1.msra.mxu0 %v928
        %1017 = vmatprep.subr.mxu0 0.0
        %1018 = vmatpush1.msra.mxu0 %v929
        %1019 = vmatprep.subr.mxu0 0.0
        %1020 = vmatpush1.msra.mxu0 0.0
        %1021 = vmatprep.subr.mxu0 0.0
        %1022 = vmatpush1.msra.mxu0 0.0
        %1023 = vmatprep.subr.mxu0 0.0
        %1024 = vmatpush1.msra.mxu0 0.0
        %1025 = vmatprep.subr.mxu0 0.0
        %1026 = vmatpush1.msra.mxu0 0.0
        %1027 = vmatprep.subr.mxu0 0.0
        %1028 = vmatpush1.msra.mxu0 0.0
        %1029 = vmatprep.subr.mxu0 0.0
        %1030 = vmatpush1.msra.mxu0 0.0
        %1031 = vmatprep.subr.mxu0 0.0
        %1032 = vmatpush1.msra.mxu0 0.0
        %1033 = vmatprep.subr.mxu0 0.0
        %1034 = vmatpush1.msra.mxu0 0.0
        %1035 = vmatprep.subr.mxu0 0.0
        %1036 = vmatpush1.msra.mxu0 0.0
        %1037 = vmatprep.subr.mxu0 0.0
        %1038 = vmatpush1.msra.mxu0 0.0
        %1039 = vmatprep.subr.mxu0 0.0
        %1040 = vmatpush1.msra.mxu0 0.0
        %1041 = vmatprep.subr.mxu0 0.0
        %1042 = vmatpush1.msra.mxu0 0.0
        %1043 = vmatprep.subr.mxu0 0.0
        %1044 = vmatpush1.msra.mxu0 0.0
        %1045 = vmatprep.subr.mxu0 0.0
        %1046 = vmatpush1.msra.mxu0 0.0
        %1047 = vmatprep.subr.mxu0 0.0
        %1048 = vmatpush1.msra.mxu0 0.0
        %1049 = vmatprep.subr.mxu0 0.0
        %1050 = vmatpush1.msra.mxu0 0.0
        %1051 = vmatprep.subr.mxu0 0.0
        %1052 = vmatpush1.msra.mxu0 0.0
        %1053 = vmatprep.subr.mxu0 0.0
        %1054 = vmatpush1.msra.mxu0 0.0
        %1055 = vmatprep.subr.mxu0 0.0
        %1056 = vmatpush1.msra.mxu0 0.0
        %1057 = vmatprep.subr.mxu0 0.0
        %1058 = vmatpush1.msra.mxu0 0.0
        %1059 = vmatprep.subr.mxu0 0.0
        %1060 = vmatpush1.msra.mxu0 0.0
        %1061 = vmatprep.subr.mxu0 0.0
        %1062 = vmatpush1.msra.mxu0 0.0
        %1063 = vmatprep.subr.mxu0 0.0
        %1064 = vmatpush1.msra.mxu0 0.0
        %1065 = vmatprep.subr.mxu0 0.0
        %1066 = vmatpush1.msra.mxu0 0.0
        %1067 = vmatprep.subr.mxu0 0.0
        %1068 = vmatpush1.msra.mxu0 0.0
        %1069 = vmatprep.subr.mxu0 0.0
        %1070 = vmatpush1.msra.mxu0 0.0
        %1071 = vmatprep.subr.mxu0 0.0
        %1072 = vmatpush1.msra.mxu0 0.0
        %1073 = vmatprep.subr.mxu0 0.0
        %1074 = vmatpush1.msra.mxu0 0.0
        %1075 = vmatprep.subr.mxu0 0.0
        %1076 = vmatpush1.msra.mxu0 0.0
        %1077 = vmatprep.subr.mxu0 0.0
        %1078 = vmatpush1.msra.mxu0 0.0
        %1079 = vmatprep.mubr.f32.mxu0 0.0
        %1080 = vmatmul.mubr.f32.gmra.mrb[0].mxu0 %v557
        %v1081 = vpop.f32.mrb[0].mxu0
        %v1082 = vadd.f32 0.0, %v1081
        %v1083 = vpop.f32.mrb[0].mxu0
        %1084 = vmatprep.mubr.f32.mxu0 0.0
        %1085 = vmatmul.mubr.f32.gmra.mrb[0].mxu0 %v560
        %v1086 = vpop.f32.mrb[0].mxu0
        %v1087 = vadd.f32 0.0, %v1086
        %v1088 = vpop.f32.mrb[0].mxu0
        %1089 = vmatprep.mubr.f32.mxu0 0.0
        %1090 = vmatmul.mubr.f32.gmra.mrb[0].mxu0 %v563
        %v1091 = vpop.f32.mrb[0].mxu0
        %v1092 = vadd.f32 0.0, %v1091
        %v1093 = vpop.f32.mrb[0].mxu0
        %1094 = vmatprep.mubr.f32.mxu0 0.0
        %1095 = vmatmul.mubr.f32.gmra.mrb[0].mxu0 %v566
        %v1096 = vpop.f32.mrb[0].mxu0
        %v1097 = vadd.f32 0.0, %v1096
        %v1098 = vpop.f32.mrb[0].mxu0
        %1099 = vdwg.mxu0
        %v1100 = vsub.f32 %v997, %v1092
        %v1101 = vsub.f32 %v1002, %v1097
        %v1102 = vmul.f32 %v295, %v1100
        %v1103 = vmul.f32 %v296, %v1101
        %v1104 = vadd.f32 %v1082, %v1007
        %v1105 = vadd.f32 %v1087, %v1012
        %v1106 = vmul.f32 %v295, %v1104
        %v1107 = vmul.f32 %v296, %v1105
        %v1108 = vsub.f32 0.0, %v1106
        %v1109 = vsub.f32 0.0, %v1107
        %1110 = vmatprep.subr.mxu0 0.0
        %1111 = vmatpush1.msra.mxu0 %v1102
        %1112 = vmatprep.subr.mxu0 0.0
        %1113 = vmatpush1.msra.mxu0 %v1103
        %1114 = vmatprep.subr.mxu0 0.0
        %1115 = vmatpush1.msra.mxu0 0.0
        %1116 = vmatprep.subr.mxu0 0.0
        %1117 = vmatpush1.msra.mxu0 0.0
        %1118 = vmatprep.subr.mxu0 0.0
        %1119 = vmatpush1.msra.mxu0 0.0
        %1120 = vmatprep.subr.mxu0 0.0
        %1121 = vmatpush1.msra.mxu0 0.0
        %1122 = vmatprep.subr.mxu0 0.0
        %1123 = vmatpush1.msra.mxu0 0.0
        %1124 = vmatprep.subr.mxu0 0.0
        %1125 = vmatpush1.msra.mxu0 0.0
        %1126 = vmatprep.subr.mxu0 0.0
        %1127 = vmatpush1.msra.mxu0 0.0
        %1128 = vmatprep.subr.mxu0 0.0
        %1129 = vmatpush1.msra.mxu0 0.0
        %1130 = vmatprep.subr.mxu0 0.0
        %1131 = vmatpush1.msra.mxu0 0.0
        %1132 = vmatprep.subr.mxu0 0.0
        %1133 = vmatpush1.msra.mxu0 0.0
        %1134 = vmatprep.subr.mxu0 0.0
        %1135 = vmatpush1.msra.mxu0 0.0
        %1136 = vmatprep.subr.mxu0 0.0
        %1137 = vmatpush1.msra.mxu0 0.0
        %1138 = vmatprep.subr.mxu0 0.0
        %1139 = vmatpush1.msra.mxu0 0.0
        %1140 = vmatprep.subr.mxu0 0.0
        %1141 = vmatpush1.msra.mxu0 0.0
        %1142 = vmatprep.subr.mxu0 0.0
        %1143 = vmatpush1.msra.mxu0 0.0
        %1144 = vmatprep.subr.mxu0 0.0
        %1145 = vmatpush1.msra.mxu0 0.0
        %1146 = vmatprep.subr.mxu0 0.0
        %1147 = vmatpush1.msra.mxu0 0.0
        %1148 = vmatprep.subr.mxu0 0.0
        %1149 = vmatpush1.msra.mxu0 0.0
        %1150 = vmatprep.subr.mxu0 0.0
        %1151 = vmatpush1.msra.mxu0 0.0
        %1152 = vmatprep.subr.mxu0 0.0
        %1153 = vmatpush1.msra.mxu0 0.0
        %1154 = vmatprep.subr.mxu0 0.0
        %1155 = vmatpush1.msra.mxu0 0.0
        %1156 = vmatprep.subr.mxu0 0.0
        %1157 = vmatpush1.msra.mxu0 0.0
        %1158 = vmatprep.subr.mxu0 0.0
        %1159 = vmatpush1.msra.mxu0 0.0
        %1160 = vmatprep.subr.mxu0 0.0
        %1161 = vmatpush1.msra.mxu0 0.0
        %1162 = vmatprep.subr.mxu0 0.0
        %1163 = vmatpush1.msra.mxu0 0.0
        %1164 = vmatprep.subr.mxu0 0.0
        %1165 = vmatpush1.msra.mxu0 0.0
        %1166 = vmatprep.subr.mxu0 0.0
        %1167 = vmatpush1.msra.mxu0 0.0
        %1168 = vmatprep.subr.mxu0 0.0
        %1169 = vmatpush1.msra.mxu0 0.0
        %1170 = vmatprep.subr.mxu0 0.0
        %1171 = vmatpush1.msra.mxu0 0.0
        %1172 = vmatprep.subr.mxu0 0.0
        %1173 = vmatpush1.msra.mxu0 0.0
        %1174 = vmatprep.mubr.f32.mxu0 0.0
        %1175 = vmatmul.mubr.f32.gmra.mrb[0].mxu0 %v557
        %v1176 = vpop.f32.mrb[0].mxu0
        %v1177 = vadd.f32 0.0, %v1176
        %v1178 = vpop.f32.mrb[0].mxu0
        %1179 = vmatprep.mubr.f32.mxu0 0.0
        %1180 = vmatmul.mubr.f32.gmra.mrb[0].mxu0 %v560
        %v1181 = vpop.f32.mrb[0].mxu0
        %v1182 = vadd.f32 0.0, %v1181
        %v1183 = vpop.f32.mrb[0].mxu0
        %1184 = vmatprep.mubr.f32.mxu0 0.0
        %1185 = vmatmul.mubr.f32.gmra.mrb[0].mxu0 %v563
        %v1186 = vpop.f32.mrb[0].mxu0
        %v1187 = vadd.f32 0.0, %v1186
        %v1188 = vpop.f32.mrb[0].mxu0
        %1189 = vmatprep.mubr.f32.mxu0 0.0
        %1190 = vmatmul.mubr.f32.gmra.mrb[0].mxu0 %v566
        %v1191 = vpop.f32.mrb[0].mxu0
        %v1192 = vadd.f32 0.0, %v1191
        %v1193 = vpop.f32.mrb[0].mxu0
        %1194 = vdwg.mxu0
        %1195 = vmatprep.subr.mxu0 0.0
        %1196 = vmatpush1.msra.mxu0 %v1108
        %1197 = vmatprep.subr.mxu0 0.0
        %1198 = vmatpush1.msra.mxu0 %v1109
        %1199 = vmatprep.subr.mxu0 0.0
        %1200 = vmatpush1.msra.mxu0 0.0
        %1201 = vmatprep.subr.mxu0 0.0
        %1202 = vmatpush1.msra.mxu0 0.0
        %1203 = vmatprep.subr.mxu0 0.0
        %1204 = vmatpush1.msra.mxu0 0.0
        %1205 = vmatprep.subr.mxu0 0.0
        %1206 = vmatpush1.msra.mxu0 0.0
        %1207 = vmatprep.subr.mxu0 0.0
        %1208 = vmatpush1.msra.mxu0 0.0
        %1209 = vmatprep.subr.mxu0 0.0
        %1210 = vmatpush1.msra.mxu0 0.0
        %1211 = vmatprep.subr.mxu0 0.0
        %1212 = vmatpush1.msra.mxu0 0.0
        %1213 = vmatprep.subr.mxu0 0.0
        %1214 = vmatpush1.msra.mxu0 0.0
        %1215 = vmatprep.subr.mxu0 0.0
        %1216 = vmatpush1.msra.mxu0 0.0
        %1217 = vmatprep.subr.mxu0 0.0
        %1218 = vmatpush1.msra.mxu0 0.0
        %1219 = vmatprep.subr.mxu0 0.0
        %1220 = vmatpush1.msra.mxu0 0.0
        %1221 = vmatprep.subr.mxu0 0.0
        %1222 = vmatpush1.msra.mxu0 0.0
        %1223 = vmatprep.subr.mxu0 0.0
        %1224 = vmatpush1.msra.mxu0 0.0
        %1225 = vmatprep.subr.mxu0 0.0
        %1226 = vmatpush1.msra.mxu0 0.0
        %1227 = vmatprep.subr.mxu0 0.0
        %1228 = vmatpush1.msra.mxu0 0.0
        %1229 = vmatprep.subr.mxu0 0.0
        %1230 = vmatpush1.msra.mxu0 0.0
        %1231 = vmatprep.subr.mxu0 0.0
        %1232 = vmatpush1.msra.mxu0 0.0
        %1233 = vmatprep.subr.mxu0 0.0
        %1234 = vmatpush1.msra.mxu0 0.0
        %1235 = vmatprep.subr.mxu0 0.0
        %1236 = vmatpush1.msra.mxu0 0.0
        %1237 = vmatprep.subr.mxu0 0.0
        %1238 = vmatpush1.msra.mxu0 0.0
        %1239 = vmatprep.subr.mxu0 0.0
        %1240 = vmatpush1.msra.mxu0 0.0
        %1241 = vmatprep.subr.mxu0 0.0
        %1242 = vmatpush1.msra.mxu0 0.0
        %1243 = vmatprep.subr.mxu0 0.0
        %1244 = vmatpush1.msra.mxu0 0.0
        %1245 = vmatprep.subr.mxu0 0.0
        %1246 = vmatpush1.msra.mxu0 0.0
        %1247 = vmatprep.subr.mxu0 0.0
        %1248 = vmatpush1.msra.mxu0 0.0
        %1249 = vmatprep.subr.mxu0 0.0
        %1250 = vmatpush1.msra.mxu0 0.0
        %1251 = vmatprep.subr.mxu0 0.0
        %1252 = vmatpush1.msra.mxu0 0.0
        %1253 = vmatprep.subr.mxu0 0.0
        %1254 = vmatpush1.msra.mxu0 0.0
        %1255 = vmatprep.subr.mxu0 0.0
        %1256 = vmatpush1.msra.mxu0 0.0
        %1257 = vmatprep.subr.mxu0 0.0
        %1258 = vmatpush1.msra.mxu0 0.0
        %1259 = vmatprep.mubr.f32.mxu0 0.0
        %1260 = vmatmul.mubr.f32.gmra.mrb[0].mxu0 %v557
        %v1261 = vpop.f32.mrb[0].mxu0
        %v1262 = vadd.f32 0.0, %v1261
        %v1263 = vpop.f32.mrb[0].mxu0
        %1264 = vmatprep.mubr.f32.mxu0 0.0
        %1265 = vmatmul.mubr.f32.gmra.mrb[0].mxu0 %v560
        %v1266 = vpop.f32.mrb[0].mxu0
        %v1267 = vadd.f32 0.0, %v1266
        %v1268 = vpop.f32.mrb[0].mxu0
        %1269 = vmatprep.mubr.f32.mxu0 0.0
        %1270 = vmatmul.mubr.f32.gmra.mrb[0].mxu0 %v563
        %v1271 = vpop.f32.mrb[0].mxu0
        %v1272 = vadd.f32 0.0, %v1271
        %v1273 = vpop.f32.mrb[0].mxu0
        %1274 = vmatprep.mubr.f32.mxu0 0.0
        %1275 = vmatmul.mubr.f32.gmra.mrb[0].mxu0 %v566
        %v1276 = vpop.f32.mrb[0].mxu0
        %v1277 = vadd.f32 0.0, %v1276
        %v1278 = vpop.f32.mrb[0].mxu0
        %1279 = vdwg.mxu0
        %v1280 = vsub.f32 %v1177, %v1272
        %v1281 = vsub.f32 %v1182, %v1277
        %1282 = vst [vmem:[#allocation4 + $0x10] sm:$0xff] %v1280
        %1283 = vst [vmem:[#allocation4 + $0x18] sm:$0xff] %v1281
        %v1284 = vadd.f32 %v1262, %v1187
        %v1285 = vadd.f32 %v1267, %v1192
        %1286 = vst [vmem:[#allocation5 + $0x10] sm:$0xff] %v1284
        %1287 = vst [vmem:[#allocation5 + $0x18] sm:$0xff] %v1285
        %v1288 = vld [vmem:[#allocation2 + $0x20] sm:$0xff]
        %v1289 = vld [vmem:[#allocation2 + $0x28] sm:$0xff]
        %v1290 = vld [vmem:[#allocation3 + $0x20] sm:$0xff]
        %v1291 = vld [vmem:[#allocation3 + $0x28] sm:$0xff]
        %1292 = vmatprep.subr.mxu0 0.0
        %1293 = vmatpush1.msra.mxu0 %v1288
        %1294 = vmatprep.subr.mxu0 0.0
        %1295 = vmatpush1.msra.mxu0 %v1289
        %1296 = vmatprep.subr.mxu0 0.0
        %1297 = vmatpush1.msra.mxu0 0.0
        %1298 = vmatprep.subr.mxu0 0.0
        %1299 = vmatpush1.msra.mxu0 0.0
        %1300 = vmatprep.subr.mxu0 0.0
        %1301 = vmatpush1.msra.mxu0 0.0
        %1302 = vmatprep.subr.mxu0 0.0
        %1303 = vmatpush1.msra.mxu0 0.0
        %1304 = vmatprep.subr.mxu0 0.0
        %1305 = vmatpush1.msra.mxu0 0.0
        %1306 = vmatprep.subr.mxu0 0.0
        %1307 = vmatpush1.msra.mxu0 0.0
        %1308 = vmatprep.subr.mxu0 0.0
        %1309 = vmatpush1.msra.mxu0 0.0
        %1310 = vmatprep.subr.mxu0 0.0
        %1311 = vmatpush1.msra.mxu0 0.0
        %1312 = vmatprep.subr.mxu0 0.0
        %1313 = vmatpush1.msra.mxu0 0.0
        %1314 = vmatprep.subr.mxu0 0.0
        %1315 = vmatpush1.msra.mxu0 0.0
        %1316 = vmatprep.subr.mxu0 0.0
        %1317 = vmatpush1.msra.mxu0 0.0
        %1318 = vmatprep.subr.mxu0 0.0
        %1319 = vmatpush1.msra.mxu0 0.0
        %1320 = vmatprep.subr.mxu0 0.0
        %1321 = vmatpush1.msra.mxu0 0.0
        %1322 = vmatprep.subr.mxu0 0.0
        %1323 = vmatpush1.msra.mxu0 0.0
        %1324 = vmatprep.subr.mxu0 0.0
        %1325 = vmatpush1.msra.mxu0 0.0
        %1326 = vmatprep.subr.mxu0 0.0
        %1327 = vmatpush1.msra.mxu0 0.0
        %1328 = vmatprep.subr.mxu0 0.0
        %1329 = vmatpush1.msra.mxu0 0.0
        %1330 = vmatprep.subr.mxu0 0.0
        %1331 = vmatpush1.msra.mxu0 0.0
        %1332 = vmatprep.subr.mxu0 0.0
        %1333 = vmatpush1.msra.mxu0 0.0
        %1334 = vmatprep.subr.mxu0 0.0
        %1335 = vmatpush1.msra.mxu0 0.0
        %1336 = vmatprep.subr.mxu0 0.0
        %1337 = vmatpush1.msra.mxu0 0.0
        %1338 = vmatprep.subr.mxu0 0.0
        %1339 = vmatpush1.msra.mxu0 0.0
        %1340 = vmatprep.subr.mxu0 0.0
        %1341 = vmatpush1.msra.mxu0 0.0
        %1342 = vmatprep.subr.mxu0 0.0
        %1343 = vmatpush1.msra.mxu0 0.0
        %1344 = vmatprep.subr.mxu0 0.0
        %1345 = vmatpush1.msra.mxu0 0.0
        %1346 = vmatprep.subr.mxu0 0.0
        %1347 = vmatpush1.msra.mxu0 0.0
        %1348 = vmatprep.subr.mxu0 0.0
        %1349 = vmatpush1.msra.mxu0 0.0
        %1350 = vmatprep.subr.mxu0 0.0
        %1351 = vmatpush1.msra.mxu0 0.0
        %1352 = vmatprep.subr.mxu0 0.0
        %1353 = vmatpush1.msra.mxu0 0.0
        %1354 = vmatprep.subr.mxu0 0.0
        %1355 = vmatpush1.msra.mxu0 0.0
        %1356 = vmatprep.mubr.f32.mxu0 0.0
        %1357 = vmatmul.mubr.f32.gmra.mrb[0].mxu0 %v557
        %v1358 = vpop.f32.mrb[0].mxu0
        %v1359 = vadd.f32 0.0, %v1358
        %v1360 = vpop.f32.mrb[0].mxu0
        %1361 = vmatprep.mubr.f32.mxu0 0.0
        %1362 = vmatmul.mubr.f32.gmra.mrb[0].mxu0 %v560
        %v1363 = vpop.f32.mrb[0].mxu0
        %v1364 = vadd.f32 0.0, %v1363
        %v1365 = vpop.f32.mrb[0].mxu0
        %1366 = vmatprep.mubr.f32.mxu0 0.0
        %1367 = vmatmul.mubr.f32.gmra.mrb[0].mxu0 %v563
        %v1368 = vpop.f32.mrb[0].mxu0
        %v1369 = vadd.f32 0.0, %v1368
        %v1370 = vpop.f32.mrb[0].mxu0
        %1371 = vmatprep.mubr.f32.mxu0 0.0
        %1372 = vmatmul.mubr.f32.gmra.mrb[0].mxu0 %v566
        %v1373 = vpop.f32.mrb[0].mxu0
        %v1374 = vadd.f32 0.0, %v1373
        %v1375 = vpop.f32.mrb[0].mxu0
        %1376 = vdwg.mxu0
        %1377 = vmatprep.subr.mxu0 0.0
        %1378 = vmatpush1.msra.mxu0 %v1290
        %1379 = vmatprep.subr.mxu0 0.0
        %1380 = vmatpush1.msra.mxu0 %v1291
        %1381 = vmatprep.subr.mxu0 0.0
        %1382 = vmatpush1.msra.mxu0 0.0
        %1383 = vmatprep.subr.mxu0 0.0
        %1384 = vmatpush1.msra.mxu0 0.0
        %1385 = vmatprep.subr.mxu0 0.0
        %1386 = vmatpush1.msra.mxu0 0.0
        %1387 = vmatprep.subr.mxu0 0.0
        %1388 = vmatpush1.msra.mxu0 0.0
        %1389 = vmatprep.subr.mxu0 0.0
        %1390 = vmatpush1.msra.mxu0 0.0
        %1391 = vmatprep.subr.mxu0 0.0
        %1392 = vmatpush1.msra.mxu0 0.0
        %1393 = vmatprep.subr.mxu0 0.0
        %1394 = vmatpush1.msra.mxu0 0.0
        %1395 = vmatprep.subr.mxu0 0.0
        %1396 = vmatpush1.msra.mxu0 0.0
        %1397 = vmatprep.subr.mxu0 0.0
        %1398 = vmatpush1.msra.mxu0 0.0
        %1399 = vmatprep.subr.mxu0 0.0
        %1400 = vmatpush1.msra.mxu0 0.0
        %1401 = vmatprep.subr.mxu0 0.0
        %1402 = vmatpush1.msra.mxu0 0.0
        %1403 = vmatprep.subr.mxu0 0.0
        %1404 = vmatpush1.msra.mxu0 0.0
        %1405 = vmatprep.subr.mxu0 0.0
        %1406 = vmatpush1.msra.mxu0 0.0
        %1407 = vmatprep.subr.mxu0 0.0
        %1408 = vmatpush1.msra.mxu0 0.0
        %1409 = vmatprep.subr.mxu0 0.0
        %1410 = vmatpush1.msra.mxu0 0.0
        %1411 = vmatprep.subr.mxu0 0.0
        %1412 = vmatpush1.msra.mxu0 0.0
        %1413 = vmatprep.subr.mxu0 0.0
        %1414 = vmatpush1.msra.mxu0 0.0
        %1415 = vmatprep.subr.mxu0 0.0
        %1416 = vmatpush1.msra.mxu0 0.0
        %1417 = vmatprep.subr.mxu0 0.0
        %1418 = vmatpush1.msra.mxu0 0.0
        %1419 = vmatprep.subr.mxu0 0.0
        %1420 = vmatpush1.msra.mxu0 0.0
        %1421 = vmatprep.subr.mxu0 0.0
        %1422 = vmatpush1.msra.mxu0 0.0
        %1423 = vmatprep.subr.mxu0 0.0
        %1424 = vmatpush1.msra.mxu0 0.0
        %1425 = vmatprep.subr.mxu0 0.0
        %1426 = vmatpush1.msra.mxu0 0.0
        %1427 = vmatprep.subr.mxu0 0.0
        %1428 = vmatpush1.msra.mxu0 0.0
        %1429 = vmatprep.subr.mxu0 0.0
        %1430 = vmatpush1.msra.mxu0 0.0
        %1431 = vmatprep.subr.mxu0 0.0
        %1432 = vmatpush1.msra.mxu0 0.0
        %1433 = vmatprep.subr.mxu0 0.0
        %1434 = vmatpush1.msra.mxu0 0.0
        %1435 = vmatprep.subr.mxu0 0.0
        %1436 = vmatpush1.msra.mxu0 0.0
        %1437 = vmatprep.subr.mxu0 0.0
        %1438 = vmatpush1.msra.mxu0 0.0
        %1439 = vmatprep.subr.mxu0 0.0
        %1440 = vmatpush1.msra.mxu0 0.0
        %1441 = vmatprep.mubr.f32.mxu0 0.0
        %1442 = vmatmul.mubr.f32.gmra.mrb[0].mxu0 %v557
        %v1443 = vpop.f32.mrb[0].mxu0
        %v1444 = vadd.f32 0.0, %v1443
        %v1445 = vpop.f32.mrb[0].mxu0
        %1446 = vmatprep.mubr.f32.mxu0 0.0
        %1447 = vmatmul.mubr.f32.gmra.mrb[0].mxu0 %v560
        %v1448 = vpop.f32.mrb[0].mxu0
        %v1449 = vadd.f32 0.0, %v1448
        %v1450 = vpop.f32.mrb[0].mxu0
        %1451 = vmatprep.mubr.f32.mxu0 0.0
        %1452 = vmatmul.mubr.f32.gmra.mrb[0].mxu0 %v563
        %v1453 = vpop.f32.mrb[0].mxu0
        %v1454 = vadd.f32 0.0, %v1453
        %v1455 = vpop.f32.mrb[0].mxu0
        %1456 = vmatprep.mubr.f32.mxu0 0.0
        %1457 = vmatmul.mubr.f32.gmra.mrb[0].mxu0 %v566
        %v1458 = vpop.f32.mrb[0].mxu0
        %v1459 = vadd.f32 0.0, %v1458
        %v1460 = vpop.f32.mrb[0].mxu0
        %1461 = vdwg.mxu0
        %v1462 = vsub.f32 %v1359, %v1454
        %v1463 = vsub.f32 %v1364, %v1459
        %v1464 = vmul.f32 %v295, %v1462
        %v1465 = vmul.f32 %v296, %v1463
        %v1466 = vadd.f32 %v1444, %v1369
        %v1467 = vadd.f32 %v1449, %v1374
        %v1468 = vmul.f32 %v295, %v1466
        %v1469 = vmul.f32 %v296, %v1467
        %v1470 = vsub.f32 0.0, %v1468
        %v1471 = vsub.f32 0.0, %v1469
        %1472 = vmatprep.subr.mxu0 0.0
        %1473 = vmatpush1.msra.mxu0 %v1464
        %1474 = vmatprep.subr.mxu0 0.0
        %1475 = vmatpush1.msra.mxu0 %v1465
        %1476 = vmatprep.subr.mxu0 0.0
        %1477 = vmatpush1.msra.mxu0 0.0
        %1478 = vmatprep.subr.mxu0 0.0
        %1479 = vmatpush1.msra.mxu0 0.0
        %1480 = vmatprep.subr.mxu0 0.0
        %1481 = vmatpush1.msra.mxu0 0.0
        %1482 = vmatprep.subr.mxu0 0.0
        %1483 = vmatpush1.msra.mxu0 0.0
        %1484 = vmatprep.subr.mxu0 0.0
        %1485 = vmatpush1.msra.mxu0 0.0
        %1486 = vmatprep.subr.mxu0 0.0
        %1487 = vmatpush1.msra.mxu0 0.0
        %1488 = vmatprep.subr.mxu0 0.0
        %1489 = vmatpush1.msra.mxu0 0.0
        %1490 = vmatprep.subr.mxu0 0.0
        %1491 = vmatpush1.msra.mxu0 0.0
        %1492 = vmatprep.subr.mxu0 0.0
        %1493 = vmatpush1.msra.mxu0 0.0
        %1494 = vmatprep.subr.mxu0 0.0
        %1495 = vmatpush1.msra.mxu0 0.0
        %1496 = vmatprep.subr.mxu0 0.0
        %1497 = vmatpush1.msra.mxu0 0.0
        %1498 = vmatprep.subr.mxu0 0.0
        %1499 = vmatpush1.msra.mxu0 0.0
        %1500 = vmatprep.subr.mxu0 0.0
        %1501 = vmatpush1.msra.mxu0 0.0
        %1502 = vmatprep.subr.mxu0 0.0
        %1503 = vmatpush1.msra.mxu0 0.0
        %1504 = vmatprep.subr.mxu0 0.0
        %1505 = vmatpush1.msra.mxu0 0.0
        %1506 = vmatprep.subr.mxu0 0.0
        %1507 = vmatpush1.msra.mxu0 0.0
        %1508 = vmatprep.subr.mxu0 0.0
        %1509 = vmatpush1.msra.mxu0 0.0
        %1510 = vmatprep.subr.mxu0 0.0
        %1511 = vmatpush1.msra.mxu0 0.0
        %1512 = vmatprep.subr.mxu0 0.0
        %1513 = vmatpush1.msra.mxu0 0.0
        %1514 = vmatprep.subr.mxu0 0.0
        %1515 = vmatpush1.msra.mxu0 0.0
        %1516 = vmatprep.subr.mxu0 0.0
        %1517 = vmatpush1.msra.mxu0 0.0
        %1518 = vmatprep.subr.mxu0 0.0
        %1519 = vmatpush1.msra.mxu0 0.0
        %1520 = vmatprep.subr.mxu0 0.0
        %1521 = vmatpush1.msra.mxu0 0.0
        %1522 = vmatprep.subr.mxu0 0.0
        %1523 = vmatpush1.msra.mxu0 0.0
        %1524 = vmatprep.subr.mxu0 0.0
        %1525 = vmatpush1.msra.mxu0 0.0
        %1526 = vmatprep.subr.mxu0 0.0
        %1527 = vmatpush1.msra.mxu0 0.0
        %1528 = vmatprep.subr.mxu0 0.0
        %1529 = vmatpush1.msra.mxu0 0.0
        %1530 = vmatprep.subr.mxu0 0.0
        %1531 = vmatpush1.msra.mxu0 0.0
        %1532 = vmatprep.subr.mxu0 0.0
        %1533 = vmatpush1.msra.mxu0 0.0
        %1534 = vmatprep.subr.mxu0 0.0
        %1535 = vmatpush1.msra.mxu0 0.0
        %1536 = vmatprep.mubr.f32.mxu0 0.0
        %1537 = vmatmul.mubr.f32.gmra.mrb[0].mxu0 %v557
        %v1538 = vpop.f32.mrb[0].mxu0
        %v1539 = vadd.f32 0.0, %v1538
        %v1540 = vpop.f32.mrb[0].mxu0
        %1541 = vmatprep.mubr.f32.mxu0 0.0
        %1542 = vmatmul.mubr.f32.gmra.mrb[0].mxu0 %v560
        %v1543 = vpop.f32.mrb[0].mxu0
        %v1544 = vadd.f32 0.0, %v1543
        %v1545 = vpop.f32.mrb[0].mxu0
        %1546 = vmatprep.mubr.f32.mxu0 0.0
        %1547 = vmatmul.mubr.f32.gmra.mrb[0].mxu0 %v563
        %v1548 = vpop.f32.mrb[0].mxu0
        %v1549 = vadd.f32 0.0, %v1548
        %v1550 = vpop.f32.mrb[0].mxu0
        %1551 = vmatprep.mubr.f32.mxu0 0.0
        %1552 = vmatmul.mubr.f32.gmra.mrb[0].mxu0 %v566
        %v1553 = vpop.f32.mrb[0].mxu0
        %v1554 = vadd.f32 0.0, %v1553
        %v1555 = vpop.f32.mrb[0].mxu0
        %1556 = vdwg.mxu0
        %1557 = vmatprep.subr.mxu0 0.0
        %1558 = vmatpush1.msra.mxu0 %v1470
        %1559 = vmatprep.subr.mxu0 0.0
        %1560 = vmatpush1.msra.mxu0 %v1471
        %1561 = vmatprep.subr.mxu0 0.0
        %1562 = vmatpush1.msra.mxu0 0.0
        %1563 = vmatprep.subr.mxu0 0.0
        %1564 = vmatpush1.msra.mxu0 0.0
        %1565 = vmatprep.subr.mxu0 0.0
        %1566 = vmatpush1.msra.mxu0 0.0
        %1567 = vmatprep.subr.mxu0 0.0
        %1568 = vmatpush1.msra.mxu0 0.0
        %1569 = vmatprep.subr.mxu0 0.0
        %1570 = vmatpush1.msra.mxu0 0.0
        %1571 = vmatprep.subr.mxu0 0.0
        %1572 = vmatpush1.msra.mxu0 0.0
        %1573 = vmatprep.subr.mxu0 0.0
        %1574 = vmatpush1.msra.mxu0 0.0
        %1575 = vmatprep.subr.mxu0 0.0
        %1576 = vmatpush1.msra.mxu0 0.0
        %1577 = vmatprep.subr.mxu0 0.0
        %1578 = vmatpush1.msra.mxu0 0.0
        %1579 = vmatprep.subr.mxu0 0.0
        %1580 = vmatpush1.msra.mxu0 0.0
        %1581 = vmatprep.subr.mxu0 0.0
        %1582 = vmatpush1.msra.mxu0 0.0
        %1583 = vmatprep.subr.mxu0 0.0
        %1584 = vmatpush1.msra.mxu0 0.0
        %1585 = vmatprep.subr.mxu0 0.0
        %1586 = vmatpush1.msra.mxu0 0.0
        %1587 = vmatprep.subr.mxu0 0.0
        %1588 = vmatpush1.msra.mxu0 0.0
        %1589 = vmatprep.subr.mxu0 0.0
        %1590 = vmatpush1.msra.mxu0 0.0
        %1591 = vmatprep.subr.mxu0 0.0
        %1592 = vmatpush1.msra.mxu0 0.0
        %1593 = vmatprep.subr.mxu0 0.0
        %1594 = vmatpush1.msra.mxu0 0.0
        %1595 = vmatprep.subr.mxu0 0.0
        %1596 = vmatpush1.msra.mxu0 0.0
        %1597 = vmatprep.subr.mxu0 0.0
        %1598 = vmatpush1.msra.mxu0 0.0
        %1599 = vmatprep.subr.mxu0 0.0
        %1600 = vmatpush1.msra.mxu0 0.0
        %1601 = vmatprep.subr.mxu0 0.0
        %1602 = vmatpush1.msra.mxu0 0.0
        %1603 = vmatprep.subr.mxu0 0.0
        %1604 = vmatpush1.msra.mxu0 0.0
        %1605 = vmatprep.subr.mxu0 0.0
        %1606 = vmatpush1.msra.mxu0 0.0
        %1607 = vmatprep.subr.mxu0 0.0
        %1608 = vmatpush1.msra.mxu0 0.0
        %1609 = vmatprep.subr.mxu0 0.0
        %1610 = vmatpush1.msra.mxu0 0.0
        %1611 = vmatprep.subr.mxu0 0.0
        %1612 = vmatpush1.msra.mxu0 0.0
        %1613 = vmatprep.subr.mxu0 0.0
        %1614 = vmatpush1.msra.mxu0 0.0
        %1615 = vmatprep.subr.mxu0 0.0
        %1616 = vmatpush1.msra.mxu0 0.0
        %1617 = vmatprep.subr.mxu0 0.0
        %1618 = vmatpush1.msra.mxu0 0.0
        %1619 = vmatprep.subr.mxu0 0.0
        %1620 = vmatpush1.msra.mxu0 0.0
        %1621 = vmatprep.mubr.f32.mxu0 0.0
        %1622 = vmatmul.mubr.f32.gmra.mrb[0].mxu0 %v557
        %v1623 = vpop.f32.mrb[0].mxu0
        %v1624 = vadd.f32 0.0, %v1623
        %v1625 = vpop.f32.mrb[0].mxu0
        %1626 = vmatprep.mubr.f32.mxu0 0.0
        %1627 = vmatmul.mubr.f32.gmra.mrb[0].mxu0 %v560
        %v1628 = vpop.f32.mrb[0].mxu0
        %v1629 = vadd.f32 0.0, %v1628
        %v1630 = vpop.f32.mrb[0].mxu0
        %1631 = vmatprep.mubr.f32.mxu0 0.0
        %1632 = vmatmul.mubr.f32.gmra.mrb[0].mxu0 %v563
        %v1633 = vpop.f32.mrb[0].mxu0
        %v1634 = vadd.f32 0.0, %v1633
        %v1635 = vpop.f32.mrb[0].mxu0
        %1636 = vmatprep.mubr.f32.mxu0 0.0
        %1637 = vmatmul.mubr.f32.gmra.mrb[0].mxu0 %v566
        %v1638 = vpop.f32.mrb[0].mxu0
        %v1639 = vadd.f32 0.0, %v1638
        %v1640 = vpop.f32.mrb[0].mxu0
        %1641 = vdwg.mxu0
        %v1642 = vsub.f32 %v1539, %v1634
        %v1643 = vsub.f32 %v1544, %v1639
        %1644 = vst [vmem:[#allocation4 + $0x20] sm:$0xff] %v1642
        %1645 = vst [vmem:[#allocation4 + $0x28] sm:$0xff] %v1643
        %v1646 = vadd.f32 %v1624, %v1549
        %v1647 = vadd.f32 %v1629, %v1554
        %1648 = vst [vmem:[#allocation5 + $0x20] sm:$0xff] %v1646
        %1649 = vst [vmem:[#allocation5 + $0x28] sm:$0xff] %v1647
        %v1650 = vld [vmem:[#allocation2 + $0x30] sm:$0xff]
        %v1651 = vld [vmem:[#allocation2 + $0x38] sm:$0xff]
        %v1652 = vld [vmem:[#allocation3 + $0x30] sm:$0xff]
        %v1653 = vld [vmem:[#allocation3 + $0x38] sm:$0xff]
        %1654 = vmatprep.subr.mxu0 0.0
        %1655 = vmatpush1.msra.mxu0 %v1650
        %1656 = vmatprep.subr.mxu0 0.0
        %1657 = vmatpush1.msra.mxu0 %v1651
        %1658 = vmatprep.subr.mxu0 0.0
        %1659 = vmatpush1.msra.mxu0 0.0
        %1660 = vmatprep.subr.mxu0 0.0
        %1661 = vmatpush1.msra.mxu0 0.0
        %1662 = vmatprep.subr.mxu0 0.0
        %1663 = vmatpush1.msra.mxu0 0.0
        %1664 = vmatprep.subr.mxu0 0.0
        %1665 = vmatpush1.msra.mxu0 0.0
        %1666 = vmatprep.subr.mxu0 0.0
        %1667 = vmatpush1.msra.mxu0 0.0
        %1668 = vmatprep.subr.mxu0 0.0
        %1669 = vmatpush1.msra.mxu0 0.0
        %1670 = vmatprep.subr.mxu0 0.0
        %1671 = vmatpush1.msra.mxu0 0.0
        %1672 = vmatprep.subr.mxu0 0.0
        %1673 = vmatpush1.msra.mxu0 0.0
        %1674 = vmatprep.subr.mxu0 0.0
        %1675 = vmatpush1.msra.mxu0 0.0
        %1676 = vmatprep.subr.mxu0 0.0
        %1677 = vmatpush1.msra.mxu0 0.0
        %1678 = vmatprep.subr.mxu0 0.0
        %1679 = vmatpush1.msra.mxu0 0.0
        %1680 = vmatprep.subr.mxu0 0.0
        %1681 = vmatpush1.msra.mxu0 0.0
        %1682 = vmatprep.subr.mxu0 0.0
        %1683 = vmatpush1.msra.mxu0 0.0
        %1684 = vmatprep.subr.mxu0 0.0
        %1685 = vmatpush1.msra.mxu0 0.0
        %1686 = vmatprep.subr.mxu0 0.0
        %1687 = vmatpush1.msra.mxu0 0.0
        %1688 = vmatprep.subr.mxu0 0.0
        %1689 = vmatpush1.msra.mxu0 0.0
        %1690 = vmatprep.subr.mxu0 0.0
        %1691 = vmatpush1.msra.mxu0 0.0
        %1692 = vmatprep.subr.mxu0 0.0
        %1693 = vmatpush1.msra.mxu0 0.0
        %1694 = vmatprep.subr.mxu0 0.0
        %1695 = vmatpush1.msra.mxu0 0.0
        %1696 = vmatprep.subr.mxu0 0.0
        %1697 = vmatpush1.msra.mxu0 0.0
        %1698 = vmatprep.subr.mxu0 0.0
        %1699 = vmatpush1.msra.mxu0 0.0
        %1700 = vmatprep.subr.mxu0 0.0
        %1701 = vmatpush1.msra.mxu0 0.0
        %1702 = vmatprep.subr.mxu0 0.0
        %1703 = vmatpush1.msra.mxu0 0.0
        %1704 = vmatprep.subr.mxu0 0.0
        %1705 = vmatpush1.msra.mxu0 0.0
        %1706 = vmatprep.subr.mxu0 0.0
        %1707 = vmatpush1.msra.mxu0 0.0
        %1708 = vmatprep.subr.mxu0 0.0
        %1709 = vmatpush1.msra.mxu0 0.0
        %1710 = vmatprep.subr.mxu0 0.0
        %1711 = vmatpush1.msra.mxu0 0.0
        %1712 = vmatprep.subr.mxu0 0.0
        %1713 = vmatpush1.msra.mxu0 0.0
        %1714 = vmatprep.subr.mxu0 0.0
        %1715 = vmatpush1.msra.mxu0 0.0
        %1716 = vmatprep.subr.mxu0 0.0
        %1717 = vmatpush1.msra.mxu0 0.0
        %1718 = vmatprep.mubr.f32.mxu0 0.0
        %1719 = vmatmul.mubr.f32.gmra.mrb[0].mxu0 %v557
        %v1720 = vpop.f32.mrb[0].mxu0
        %v1721 = vadd.f32 0.0, %v1720
        %v1722 = vpop.f32.mrb[0].mxu0
        %1723 = vmatprep.mubr.f32.mxu0 0.0
        %1724 = vmatmul.mubr.f32.gmra.mrb[0].mxu0 %v560
        %v1725 = vpop.f32.mrb[0].mxu0
        %v1726 = vadd.f32 0.0, %v1725
        %v1727 = vpop.f32.mrb[0].mxu0
        %1728 = vmatprep.mubr.f32.mxu0 0.0
        %1729 = vmatmul.mubr.f32.gmra.mrb[0].mxu0 %v563
        %v1730 = vpop.f32.mrb[0].mxu0
        %v1731 = vadd.f32 0.0, %v1730
        %v1732 = vpop.f32.mrb[0].mxu0
        %1733 = vmatprep.mubr.f32.mxu0 0.0
        %1734 = vmatmul.mubr.f32.gmra.mrb[0].mxu0 %v566
        %v1735 = vpop.f32.mrb[0].mxu0
        %v1736 = vadd.f32 0.0, %v1735
        %v1737 = vpop.f32.mrb[0].mxu0
        %1738 = vdwg.mxu0
        %1739 = vmatprep.subr.mxu0 0.0
        %1740 = vmatpush1.msra.mxu0 %v1652
        %1741 = vmatprep.subr.mxu0 0.0
        %1742 = vmatpush1.msra.mxu0 %v1653
        %1743 = vmatprep.subr.mxu0 0.0
        %1744 = vmatpush1.msra.mxu0 0.0
        %1745 = vmatprep.subr.mxu0 0.0
        %1746 = vmatpush1.msra.mxu0 0.0
        %1747 = vmatprep.subr.mxu0 0.0
        %1748 = vmatpush1.msra.mxu0 0.0
        %1749 = vmatprep.subr.mxu0 0.0
        %1750 = vmatpush1.msra.mxu0 0.0
        %1751 = vmatprep.subr.mxu0 0.0
        %1752 = vmatpush1.msra.mxu0 0.0
        %1753 = vmatprep.subr.mxu0 0.0
        %1754 = vmatpush1.msra.mxu0 0.0
        %1755 = vmatprep.subr.mxu0 0.0
        %1756 = vmatpush1.msra.mxu0 0.0
        %1757 = vmatprep.subr.mxu0 0.0
        %1758 = vmatpush1.msra.mxu0 0.0
        %1759 = vmatprep.subr.mxu0 0.0
        %1760 = vmatpush1.msra.mxu0 0.0
        %1761 = vmatprep.subr.mxu0 0.0
        %1762 = vmatpush1.msra.mxu0 0.0
        %1763 = vmatprep.subr.mxu0 0.0
        %1764 = vmatpush1.msra.mxu0 0.0
        %1765 = vmatprep.subr.mxu0 0.0
        %1766 = vmatpush1.msra.mxu0 0.0
        %1767 = vmatprep.subr.mxu0 0.0
        %1768 = vmatpush1.msra.mxu0 0.0
        %1769 = vmatprep.subr.mxu0 0.0
        %1770 = vmatpush1.msra.mxu0 0.0
        %1771 = vmatprep.subr.mxu0 0.0
        %1772 = vmatpush1.msra.mxu0 0.0
        %1773 = vmatprep.subr.mxu0 0.0
        %1774 = vmatpush1.msra.mxu0 0.0
        %1775 = vmatprep.subr.mxu0 0.0
        %1776 = vmatpush1.msra.mxu0 0.0
        %1777 = vmatprep.subr.mxu0 0.0
        %1778 = vmatpush1.msra.mxu0 0.0
        %1779 = vmatprep.subr.mxu0 0.0
        %1780 = vmatpush1.msra.mxu0 0.0
        %1781 = vmatprep.subr.mxu0 0.0
        %1782 = vmatpush1.msra.mxu0 0.0
        %1783 = vmatprep.subr.mxu0 0.0
        %1784 = vmatpush1.msra.mxu0 0.0
        %1785 = vmatprep.subr.mxu0 0.0
        %1786 = vmatpush1.msra.mxu0 0.0
        %1787 = vmatprep.subr.mxu0 0.0
        %1788 = vmatpush1.msra.mxu0 0.0
        %1789 = vmatprep.subr.mxu0 0.0
        %1790 = vmatpush1.msra.mxu0 0.0
        %1791 = vmatprep.subr.mxu0 0.0
        %1792 = vmatpush1.msra.mxu0 0.0
        %1793 = vmatprep.subr.mxu0 0.0
        %1794 = vmatpush1.msra.mxu0 0.0
        %1795 = vmatprep.subr.mxu0 0.0
        %1796 = vmatpush1.msra.mxu0 0.0
        %1797 = vmatprep.subr.mxu0 0.0
        %1798 = vmatpush1.msra.mxu0 0.0
        %1799 = vmatprep.subr.mxu0 0.0
        %1800 = vmatpush1.msra.mxu0 0.0
        %1801 = vmatprep.subr.mxu0 0.0
        %1802 = vmatpush1.msra.mxu0 0.0
        %1803 = vmatprep.mubr.f32.mxu0 0.0
        %1804 = vmatmul.mubr.f32.gmra.mrb[0].mxu0 %v557
        %v1805 = vpop.f32.mrb[0].mxu0
        %v1806 = vadd.f32 0.0, %v1805
        %v1807 = vpop.f32.mrb[0].mxu0
        %1808 = vmatprep.mubr.f32.mxu0 0.0
        %1809 = vmatmul.mubr.f32.gmra.mrb[0].mxu0 %v560
        %v1810 = vpop.f32.mrb[0].mxu0
        %v1811 = vadd.f32 0.0, %v1810
        %v1812 = vpop.f32.mrb[0].mxu0
        %1813 = vmatprep.mubr.f32.mxu0 0.0
        %1814 = vmatmul.mubr.f32.gmra.mrb[0].mxu0 %v563
        %v1815 = vpop.f32.mrb[0].mxu0
        %v1816 = vadd.f32 0.0, %v1815
        %v1817 = vpop.f32.mrb[0].mxu0
        %1818 = vmatprep.mubr.f32.mxu0 0.0
        %1819 = vmatmul.mubr.f32.gmra.mrb[0].mxu0 %v566
        %v1820 = vpop.f32.mrb[0].mxu0
        %v1821 = vadd.f32 0.0, %v1820
        %v1822 = vpop.f32.mrb[0].mxu0
        %1823 = vdwg.mxu0
        %v1824 = vsub.f32 %v1721, %v1816
        %v1825 = vsub.f32 %v1726, %v1821
        %v1826 = vmul.f32 %v295, %v1824
        %v1827 = vmul.f32 %v296, %v1825
        %v1828 = vadd.f32 %v1806, %v1731
        %v1829 = vadd.f32 %v1811, %v1736
        %v1830 = vmul.f32 %v295, %v1828
        %v1831 = vmul.f32 %v296, %v1829
        %v1832 = vsub.f32 0.0, %v1830
        %v1833 = vsub.f32 0.0, %v1831
        %1834 = vmatprep.subr.mxu0 0.0
        %1835 = vmatpush1.msra.mxu0 %v1826
        %1836 = vmatprep.subr.mxu0 0.0
        %1837 = vmatpush1.msra.mxu0 %v1827
        %1838 = vmatprep.subr.mxu0 0.0
        %1839 = vmatpush1.msra.mxu0 0.0
        %1840 = vmatprep.subr.mxu0 0.0
        %1841 = vmatpush1.msra.mxu0 0.0
        %1842 = vmatprep.subr.mxu0 0.0
        %1843 = vmatpush1.msra.mxu0 0.0
        %1844 = vmatprep.subr.mxu0 0.0
        %1845 = vmatpush1.msra.mxu0 0.0
        %1846 = vmatprep.subr.mxu0 0.0
        %1847 = vmatpush1.msra.mxu0 0.0
        %1848 = vmatprep.subr.mxu0 0.0
        %1849 = vmatpush1.msra.mxu0 0.0
        %1850 = vmatprep.subr.mxu0 0.0
        %1851 = vmatpush1.msra.mxu0 0.0
        %1852 = vmatprep.subr.mxu0 0.0
        %1853 = vmatpush1.msra.mxu0 0.0
        %1854 = vmatprep.subr.mxu0 0.0
        %1855 = vmatpush1.msra.mxu0 0.0
        %1856 = vmatprep.subr.mxu0 0.0
        %1857 = vmatpush1.msra.mxu0 0.0
        %1858 = vmatprep.subr.mxu0 0.0
        %1859 = vmatpush1.msra.mxu0 0.0
        %1860 = vmatprep.subr.mxu0 0.0
        %1861 = vmatpush1.msra.mxu0 0.0
        %1862 = vmatprep.subr.mxu0 0.0
        %1863 = vmatpush1.msra.mxu0 0.0
        %1864 = vmatprep.subr.mxu0 0.0
        %1865 = vmatpush1.msra.mxu0 0.0
        %1866 = vmatprep.subr.mxu0 0.0
        %1867 = vmatpush1.msra.mxu0 0.0
        %1868 = vmatprep.subr.mxu0 0.0
        %1869 = vmatpush1.msra.mxu0 0.0
        %1870 = vmatprep.subr.mxu0 0.0
        %1871 = vmatpush1.msra.mxu0 0.0
        %1872 = vmatprep.subr.mxu0 0.0
        %1873 = vmatpush1.msra.mxu0 0.0
        %1874 = vmatprep.subr.mxu0 0.0
        %1875 = vmatpush1.msra.mxu0 0.0
        %1876 = vmatprep.subr.mxu0 0.0
        %1877 = vmatpush1.msra.mxu0 0.0
        %1878 = vmatprep.subr.mxu0 0.0
        %1879 = vmatpush1.msra.mxu0 0.0
        %1880 = vmatprep.subr.mxu0 0.0
        %1881 = vmatpush1.msra.mxu0 0.0
        %1882 = vmatprep.subr.mxu0 0.0
        %1883 = vmatpush1.msra.mxu0 0.0
        %1884 = vmatprep.subr.mxu0 0.0
        %1885 = vmatpush1.msra.mxu0 0.0
        %1886 = vmatprep.subr.mxu0 0.0
        %1887 = vmatpush1.msra.mxu0 0.0
        %1888 = vmatprep.subr.mxu0 0.0
        %1889 = vmatpush1.msra.mxu0 0.0
        %1890 = vmatprep.subr.mxu0 0.0
        %1891 = vmatpush1.msra.mxu0 0.0
        %1892 = vmatprep.subr.mxu0 0.0
        %1893 = vmatpush1.msra.mxu0 0.0
        %1894 = vmatprep.subr.mxu0 0.0
        %1895 = vmatpush1.msra.mxu0 0.0
        %1896 = vmatprep.subr.mxu0 0.0
        %1897 = vmatpush1.msra.mxu0 0.0
        %1898 = vmatprep.mubr.f32.mxu0 0.0
        %1899 = vmatmul.mubr.f32.gmra.mrb[0].mxu0 %v557
        %v1900 = vpop.f32.mrb[0].mxu0
        %v1901 = vadd.f32 0.0, %v1900
        %v1902 = vpop.f32.mrb[0].mxu0
        %1903 = vmatprep.mubr.f32.mxu0 0.0
        %1904 = vmatmul.mubr.f32.gmra.mrb[0].mxu0 %v560
        %v1905 = vpop.f32.mrb[0].mxu0
        %v1906 = vadd.f32 0.0, %v1905
        %v1907 = vpop.f32.mrb[0].mxu0
        %1908 = vmatprep.mubr.f32.mxu0 0.0
        %1909 = vmatmul.mubr.f32.gmra.mrb[0].mxu0 %v563
        %v1910 = vpop.f32.mrb[0].mxu0
        %v1911 = vadd.f32 0.0, %v1910
        %v1912 = vpop.f32.mrb[0].mxu0
        %1913 = vmatprep.mubr.f32.mxu0 0.0
        %1914 = vmatmul.mubr.f32.gmra.mrb[0].mxu0 %v566
        %v1915 = vpop.f32.mrb[0].mxu0
        %v1916 = vadd.f32 0.0, %v1915
        %v1917 = vpop.f32.mrb[0].mxu0
        %1918 = vdwg.mxu0
        %1919 = vmatprep.subr.mxu0 0.0
        %1920 = vmatpush1.msra.mxu0 %v1832
        %1921 = vmatprep.subr.mxu0 0.0
        %1922 = vmatpush1.msra.mxu0 %v1833
        %1923 = vmatprep.subr.mxu0 0.0
        %1924 = vmatpush1.msra.mxu0 0.0
        %1925 = vmatprep.subr.mxu0 0.0
        %1926 = vmatpush1.msra.mxu0 0.0
        %1927 = vmatprep.subr.mxu0 0.0
        %1928 = vmatpush1.msra.mxu0 0.0
        %1929 = vmatprep.subr.mxu0 0.0
        %1930 = vmatpush1.msra.mxu0 0.0
        %1931 = vmatprep.subr.mxu0 0.0
        %1932 = vmatpush1.msra.mxu0 0.0
        %1933 = vmatprep.subr.mxu0 0.0
        %1934 = vmatpush1.msra.mxu0 0.0
        %1935 = vmatprep.subr.mxu0 0.0
        %1936 = vmatpush1.msra.mxu0 0.0
        %1937 = vmatprep.subr.mxu0 0.0
        %1938 = vmatpush1.msra.mxu0 0.0
        %1939 = vmatprep.subr.mxu0 0.0
        %1940 = vmatpush1.msra.mxu0 0.0
        %1941 = vmatprep.subr.mxu0 0.0
        %1942 = vmatpush1.msra.mxu0 0.0
        %1943 = vmatprep.subr.mxu0 0.0
        %1944 = vmatpush1.msra.mxu0 0.0
        %1945 = vmatprep.subr.mxu0 0.0
        %1946 = vmatpush1.msra.mxu0 0.0
        %1947 = vmatprep.subr.mxu0 0.0
        %1948 = vmatpush1.msra.mxu0 0.0
        %1949 = vmatprep.subr.mxu0 0.0
        %1950 = vmatpush1.msra.mxu0 0.0
        %1951 = vmatprep.subr.mxu0 0.0
        %1952 = vmatpush1.msra.mxu0 0.0
        %1953 = vmatprep.subr.mxu0 0.0
        %1954 = vmatpush1.msra.mxu0 0.0
        %1955 = vmatprep.subr.mxu0 0.0
        %1956 = vmatpush1.msra.mxu0 0.0
        %1957 = vmatprep.subr.mxu0 0.0
        %1958 = vmatpush1.msra.mxu0 0.0
        %1959 = vmatprep.subr.mxu0 0.0
        %1960 = vmatpush1.msra.mxu0 0.0
        %1961 = vmatprep.subr.mxu0 0.0
        %1962 = vmatpush1.msra.mxu0 0.0
        %1963 = vmatprep.subr.mxu0 0.0
        %1964 = vmatpush1.msra.mxu0 0.0
        %1965 = vmatprep.subr.mxu0 0.0
        %1966 = vmatpush1.msra.mxu0 0.0
        %1967 = vmatprep.subr.mxu0 0.0
        %1968 = vmatpush1.msra.mxu0 0.0
        %1969 = vmatprep.subr.mxu0 0.0
        %1970 = vmatpush1.msra.mxu0 0.0
        %1971 = vmatprep.subr.mxu0 0.0
        %1972 = vmatpush1.msra.mxu0 0.0
        %1973 = vmatprep.subr.mxu0 0.0
        %1974 = vmatpush1.msra.mxu0 0.0
        %1975 = vmatprep.subr.mxu0 0.0
        %1976 = vmatpush1.msra.mxu0 0.0
        %1977 = vmatprep.subr.mxu0 0.0
        %1978 = vmatpush1.msra.mxu0 0.0
        %1979 = vmatprep.subr.mxu0 0.0
        %1980 = vmatpush1.msra.mxu0 0.0
        %1981 = vmatprep.subr.mxu0 0.0
        %1982 = vmatpush1.msra.mxu0 0.0
        %1983 = vmatprep.mubr.f32.mxu0 0.0
        %1984 = vmatmul.mubr.f32.gmra.mrb[0].mxu0 %v557
        %v1985 = vpop.f32.mrb[0].mxu0
        %v1986 = vadd.f32 0.0, %v1985
        %v1987 = vpop.f32.mrb[0].mxu0
        %1988 = vmatprep.mubr.f32.mxu0 0.0
        %1989 = vmatmul.mubr.f32.gmra.mrb[0].mxu0 %v560
        %v1990 = vpop.f32.mrb[0].mxu0
        %v1991 = vadd.f32 0.0, %v1990
        %v1992 = vpop.f32.mrb[0].mxu0
        %1993 = vmatprep.mubr.f32.mxu0 0.0
        %1994 = vmatmul.mubr.f32.gmra.mrb[0].mxu0 %v563
        %v1995 = vpop.f32.mrb[0].mxu0
        %v1996 = vadd.f32 0.0, %v1995
        %v1997 = vpop.f32.mrb[0].mxu0
        %1998 = vmatprep.mubr.f32.mxu0 0.0
        %1999 = vmatmul.mubr.f32.gmra.mrb[0].mxu0 %v566
        %v2000 = vpop.f32.mrb[0].mxu0
        %v2001 = vadd.f32 0.0, %v2000
        %v2002 = vpop.f32.mrb[0].mxu0
        %2003 = vdwg.mxu0
        %v2004 = vsub.f32 %v1901, %v1996
        %v2005 = vsub.f32 %v1906, %v2001
        %2006 = vst [vmem:[#allocation4 + $0x30] sm:$0xff] %v2004
        %2007 = vst [vmem:[#allocation4 + $0x38] sm:$0xff] %v2005
        %v2008 = vadd.f32 %v1986, %v1911
        %v2009 = vadd.f32 %v1991, %v1916
        %2010 = vst [vmem:[#allocation5 + $0x30] sm:$0xff] %v2008
        %2011 = vst [vmem:[#allocation5 + $0x38] sm:$0xff] %v2009
        %v2012 = vld [vmem:[#allocation4] sm:$0xff]
        %v2013 = vld [vmem:[#allocation4 + $0x8] sm:$0xff]
        %v2014 = vld [vmem:[#allocation4 + $0x10] sm:$0xff]
        %v2015 = vld [vmem:[#allocation4 + $0x18] sm:$0xff]
        %v2016 = vld [vmem:[#allocation4 + $0x20] sm:$0xff]
        %v2017 = vld [vmem:[#allocation4 + $0x28] sm:$0xff]
        %v2018 = vld [vmem:[#allocation4 + $0x30] sm:$0xff]
        %v2019 = vld [vmem:[#allocation4 + $0x38] sm:$0xff]
        %v2020 = vld [vmem:[%s4] sm:$0xff]
        %v2021 = vld [vmem:[%s4 + $0x8] sm:$0xff]
        %v2022 = vld [vmem:[%s4 + $0x10] sm:$0xff]
        %v2023 = vld [vmem:[%s4 + $0x18] sm:$0xff]
        %v2024 = vld [vmem:[%s4 + $0x20] sm:$0xff]
        %v2025 = vld [vmem:[%s4 + $0x28] sm:$0xff]
        %v2026 = vld [vmem:[%s4 + $0x30] sm:$0xff]
        %v2027 = vld [vmem:[%s4 + $0x38] sm:$0xff]
        %v2028 = vld [vmem:[%s4 + $0x40] sm:$0xff]
        %v2029 = vld [vmem:[%s4 + $0x48] sm:$0xff]
        %v2030 = vld [vmem:[%s4 + $0x50] sm:$0xff]
        %v2031 = vld [vmem:[%s4 + $0x58] sm:$0xff]
        %v2032 = vld [vmem:[%s4 + $0x60] sm:$0xff]
        %v2033 = vld [vmem:[%s4 + $0x68] sm:$0xff]
        %v2034 = vld [vmem:[%s4 + $0x70] sm:$0xff]
        %v2035 = vld [vmem:[%s4 + $0x78] sm:$0xff]
        %v2036 = vld [vmem:[#allocation5] sm:$0xff]
        %v2037 = vld [vmem:[#allocation5 + $0x8] sm:$0xff]
        %v2038 = vld [vmem:[#allocation5 + $0x10] sm:$0xff]
        %v2039 = vld [vmem:[#allocation5 + $0x18] sm:$0xff]
        %v2040 = vld [vmem:[#allocation5 + $0x20] sm:$0xff]
        %v2041 = vld [vmem:[#allocation5 + $0x28] sm:$0xff]
        %v2042 = vld [vmem:[#allocation5 + $0x30] sm:$0xff]
        %v2043 = vld [vmem:[#allocation5 + $0x38] sm:$0xff]
        %v2044 = vld [vmem:[%s5] sm:$0xff]
        %v2045 = vld [vmem:[%s5 + $0x8] sm:$0xff]
        %v2046 = vld [vmem:[%s5 + $0x10] sm:$0xff]
        %v2047 = vld [vmem:[%s5 + $0x18] sm:$0xff]
        %v2048 = vld [vmem:[%s5 + $0x20] sm:$0xff]
        %v2049 = vld [vmem:[%s5 + $0x28] sm:$0xff]
        %v2050 = vld [vmem:[%s5 + $0x30] sm:$0xff]
        %v2051 = vld [vmem:[%s5 + $0x38] sm:$0xff]
        %v2052 = vld [vmem:[%s5 + $0x40] sm:$0xff]
        %v2053 = vld [vmem:[%s5 + $0x48] sm:$0xff]
        %v2054 = vld [vmem:[%s5 + $0x50] sm:$0xff]
        %v2055 = vld [vmem:[%s5 + $0x58] sm:$0xff]
        %v2056 = vld [vmem:[%s5 + $0x60] sm:$0xff]
        %v2057 = vld [vmem:[%s5 + $0x68] sm:$0xff]
        %v2058 = vld [vmem:[%s5 + $0x70] sm:$0xff]
        %v2059 = vld [vmem:[%s5 + $0x78] sm:$0xff]
        %2060 = vmatprep.subr.mxu0 0.0
        %2061 = vmatpush1.msra.mxu0 %v2044
        %2062 = vmatprep.subr.mxu0 0.0
        %2063 = vmatpush1.msra.mxu0 %v2045
        %2064 = vmatprep.subr.mxu0 0.0
        %2065 = vmatpush1.msra.mxu0 %v2046
        %2066 = vmatprep.subr.mxu0 0.0
        %2067 = vmatpush1.msra.mxu0 %v2047
        %2068 = vmatprep.subr.mxu0 0.0
        %2069 = vmatpush1.msra.mxu0 %v2048
        %2070 = vmatprep.subr.mxu0 0.0
        %2071 = vmatpush1.msra.mxu0 %v2049
        %2072 = vmatprep.subr.mxu0 0.0
        %2073 = vmatpush1.msra.mxu0 %v2050
        %2074 = vmatprep.subr.mxu0 0.0
        %2075 = vmatpush1.msra.mxu0 %v2051
        %2076 = vmatprep.subr.mxu0 0.0
        %2077 = vmatpush1.msra.mxu0 %v2052
        %2078 = vmatprep.subr.mxu0 0.0
        %2079 = vmatpush1.msra.mxu0 %v2053
        %2080 = vmatprep.subr.mxu0 0.0
        %2081 = vmatpush1.msra.mxu0 %v2054
        %2082 = vmatprep.subr.mxu0 0.0
        %2083 = vmatpush1.msra.mxu0 %v2055
        %2084 = vmatprep.subr.mxu0 0.0
        %2085 = vmatpush1.msra.mxu0 %v2056
        %2086 = vmatprep.subr.mxu0 0.0
        %2087 = vmatpush1.msra.mxu0 %v2057
        %2088 = vmatprep.subr.mxu0 0.0
        %2089 = vmatpush1.msra.mxu0 %v2058
        %2090 = vmatprep.subr.mxu0 0.0
        %2091 = vmatpush1.msra.mxu0 %v2059
        %2092 = vmatprep.subr.mxu0 0.0
        %2093 = vmatpush1.msra.mxu0 0.0
        %2094 = vmatprep.subr.mxu0 0.0
        %2095 = vmatpush1.msra.mxu0 0.0
        %2096 = vmatprep.subr.mxu0 0.0
        %2097 = vmatpush1.msra.mxu0 0.0
        %2098 = vmatprep.subr.mxu0 0.0
        %2099 = vmatpush1.msra.mxu0 0.0
        %2100 = vmatprep.subr.mxu0 0.0
        %2101 = vmatpush1.msra.mxu0 0.0
        %2102 = vmatprep.subr.mxu0 0.0
        %2103 = vmatpush1.msra.mxu0 0.0
        %2104 = vmatprep.subr.mxu0 0.0
        %2105 = vmatpush1.msra.mxu0 0.0
        %2106 = vmatprep.subr.mxu0 0.0
        %2107 = vmatpush1.msra.mxu0 0.0
        %2108 = vmatprep.subr.mxu0 0.0
        %2109 = vmatpush1.msra.mxu0 0.0
        %2110 = vmatprep.subr.mxu0 0.0
        %2111 = vmatpush1.msra.mxu0 0.0
        %2112 = vmatprep.subr.mxu0 0.0
        %2113 = vmatpush1.msra.mxu0 0.0
        %2114 = vmatprep.subr.mxu0 0.0
        %2115 = vmatpush1.msra.mxu0 0.0
        %2116 = vmatprep.subr.mxu0 0.0
        %2117 = vmatpush1.msra.mxu0 0.0
        %2118 = vmatprep.subr.mxu0 0.0
        %2119 = vmatpush1.msra.mxu0 0.0
        %2120 = vmatprep.subr.mxu0 0.0
        %2121 = vmatpush1.msra.mxu0 0.0
        %2122 = vmatprep.subr.mxu0 0.0
        %2123 = vmatpush1.msra.mxu0 0.0
        %2124 = vmatprep.mubr.f32.mxu0 0.0
        %2125 = vmatmul.mubr.f32.gmra.mrb[0].mxu0 %v2036
        %v2126 = vpop.f32.mrb[0].mxu0
        %v2127 = vadd.f32 0.0, %v2126
        %v2128 = vpop.f32.mrb[0].mxu0
        %2129 = vmatprep.mubr.f32.mxu0 0.0
        %2130 = vmatmul.mubr.f32.gmra.mrb[0].mxu0 %v2037
        %v2131 = vpop.f32.mrb[0].mxu0
        %v2132 = vadd.f32 0.0, %v2131
        %v2133 = vpop.f32.mrb[0].mxu0
        %2134 = vmatprep.mubr.f32.mxu0 0.0
        %2135 = vmatmul.mubr.f32.gmra.mrb[0].mxu0 %v2038
        %v2136 = vpop.f32.mrb[0].mxu0
        %v2137 = vadd.f32 0.0, %v2136
        %v2138 = vpop.f32.mrb[0].mxu0
        %2139 = vmatprep.mubr.f32.mxu0 0.0
        %2140 = vmatmul.mubr.f32.gmra.mrb[0].mxu0 %v2039
        %v2141 = vpop.f32.mrb[0].mxu0
        %v2142 = vadd.f32 0.0, %v2141
        %v2143 = vpop.f32.mrb[0].mxu0
        %2144 = vmatprep.mubr.f32.mxu0 0.0
        %2145 = vmatmul.mubr.f32.gmra.mrb[0].mxu0 %v2040
        %v2146 = vpop.f32.mrb[0].mxu0
        %v2147 = vadd.f32 0.0, %v2146
        %v2148 = vpop.f32.mrb[0].mxu0
        %2149 = vmatprep.mubr.f32.mxu0 0.0
        %2150 = vmatmul.mubr.f32.gmra.mrb[0].mxu0 %v2041
        %v2151 = vpop.f32.mrb[0].mxu0
        %v2152 = vadd.f32 0.0, %v2151
        %v2153 = vpop.f32.mrb[0].mxu0
        %2154 = vmatprep.mubr.f32.mxu0 0.0
        %2155 = vmatmul.mubr.f32.gmra.mrb[0].mxu0 %v2042
        %v2156 = vpop.f32.mrb[0].mxu0
        %v2157 = vadd.f32 0.0, %v2156
        %v2158 = vpop.f32.mrb[0].mxu0
        %2159 = vmatprep.mubr.f32.mxu0 0.0
        %2160 = vmatmul.mubr.f32.gmra.mrb[0].mxu0 %v2043
        %v2161 = vpop.f32.mrb[0].mxu0
        %v2162 = vadd.f32 0.0, %v2161
        %v2163 = vpop.f32.mrb[0].mxu0
        %2164 = vdwg.mxu0
        %2165 = vmatprep.subr.mxu0 0.0
        %2166 = vmatpush1.msra.mxu0 %v2020
        %2167 = vmatprep.subr.mxu0 0.0
        %2168 = vmatpush1.msra.mxu0 %v2021
        %2169 = vmatprep.subr.mxu0 0.0
        %2170 = vmatpush1.msra.mxu0 %v2022
        %2171 = vmatprep.subr.mxu0 0.0
        %2172 = vmatpush1.msra.mxu0 %v2023
        %2173 = vmatprep.subr.mxu0 0.0
        %2174 = vmatpush1.msra.mxu0 %v2024
        %2175 = vmatprep.subr.mxu0 0.0
        %2176 = vmatpush1.msra.mxu0 %v2025
        %2177 = vmatprep.subr.mxu0 0.0
        %2178 = vmatpush1.msra.mxu0 %v2026
        %2179 = vmatprep.subr.mxu0 0.0
        %2180 = vmatpush1.msra.mxu0 %v2027
        %2181 = vmatprep.subr.mxu0 0.0
        %2182 = vmatpush1.msra.mxu0 %v2028
        %2183 = vmatprep.subr.mxu0 0.0
        %2184 = vmatpush1.msra.mxu0 %v2029
        %2185 = vmatprep.subr.mxu0 0.0
        %2186 = vmatpush1.msra.mxu0 %v2030
        %2187 = vmatprep.subr.mxu0 0.0
        %2188 = vmatpush1.msra.mxu0 %v2031
        %2189 = vmatprep.subr.mxu0 0.0
        %2190 = vmatpush1.msra.mxu0 %v2032
        %2191 = vmatprep.subr.mxu0 0.0
        %2192 = vmatpush1.msra.mxu0 %v2033
        %2193 = vmatprep.subr.mxu0 0.0
        %2194 = vmatpush1.msra.mxu0 %v2034
        %2195 = vmatprep.subr.mxu0 0.0
        %2196 = vmatpush1.msra.mxu0 %v2035
        %2197 = vmatprep.subr.mxu0 0.0
        %2198 = vmatpush1.msra.mxu0 0.0
        %2199 = vmatprep.subr.mxu0 0.0
        %2200 = vmatpush1.msra.mxu0 0.0
        %2201 = vmatprep.subr.mxu0 0.0
        %2202 = vmatpush1.msra.mxu0 0.0
        %2203 = vmatprep.subr.mxu0 0.0
        %2204 = vmatpush1.msra.mxu0 0.0
        %2205 = vmatprep.subr.mxu0 0.0
        %2206 = vmatpush1.msra.mxu0 0.0
        %2207 = vmatprep.subr.mxu0 0.0
        %2208 = vmatpush1.msra.mxu0 0.0
        %2209 = vmatprep.subr.mxu0 0.0
        %2210 = vmatpush1.msra.mxu0 0.0
        %2211 = vmatprep.subr.mxu0 0.0
        %2212 = vmatpush1.msra.mxu0 0.0
        %2213 = vmatprep.subr.mxu0 0.0
        %2214 = vmatpush1.msra.mxu0 0.0
        %2215 = vmatprep.subr.mxu0 0.0
        %2216 = vmatpush1.msra.mxu0 0.0
        %2217 = vmatprep.subr.mxu0 0.0
        %2218 = vmatpush1.msra.mxu0 0.0
        %2219 = vmatprep.subr.mxu0 0.0
        %2220 = vmatpush1.msra.mxu0 0.0
        %2221 = vmatprep.subr.mxu0 0.0
        %2222 = vmatpush1.msra.mxu0 0.0
        %2223 = vmatprep.subr.mxu0 0.0
        %2224 = vmatpush1.msra.mxu0 0.0
        %2225 = vmatprep.subr.mxu0 0.0
        %2226 = vmatpush1.msra.mxu0 0.0
        %2227 = vmatprep.subr.mxu0 0.0
        %2228 = vmatpush1.msra.mxu0 0.0
        %2229 = vmatprep.mubr.f32.mxu0 0.0
        %2230 = vmatmul.mubr.f32.gmra.mrb[0].mxu0 %v2012
        %v2231 = vpop.f32.mrb[0].mxu0
        %v2232 = vadd.f32 %v2127, %v2231
        %v2233 = vpop.f32.mrb[0].mxu0
        %2234 = vmatprep.mubr.f32.mxu0 0.0
        %2235 = vmatmul.mubr.f32.gmra.mrb[0].mxu0 %v2013
        %v2236 = vpop.f32.mrb[0].mxu0
        %v2237 = vadd.f32 %v2132, %v2236
        %v2238 = vpop.f32.mrb[0].mxu0
        %2239 = vmatprep.mubr.f32.mxu0 0.0
        %2240 = vmatmul.mubr.f32.gmra.mrb[0].mxu0 %v2014
        %v2241 = vpop.f32.mrb[0].mxu0
        %v2242 = vadd.f32 %v2137, %v2241
        %v2243 = vpop.f32.mrb[0].mxu0
        %2244 = vmatprep.mubr.f32.mxu0 0.0
        %2245 = vmatmul.mubr.f32.gmra.mrb[0].mxu0 %v2015
        %v2246 = vpop.f32.mrb[0].mxu0
        %v2247 = vadd.f32 %v2142, %v2246
        %v2248 = vpop.f32.mrb[0].mxu0
        %2249 = vmatprep.mubr.f32.mxu0 0.0
        %2250 = vmatmul.mubr.f32.gmra.mrb[0].mxu0 %v2016
        %v2251 = vpop.f32.mrb[0].mxu0
        %v2252 = vadd.f32 %v2147, %v2251
        %v2253 = vpop.f32.mrb[0].mxu0
        %2254 = vmatprep.mubr.f32.mxu0 0.0
        %2255 = vmatmul.mubr.f32.gmra.mrb[0].mxu0 %v2017
        %v2256 = vpop.f32.mrb[0].mxu0
        %v2257 = vadd.f32 %v2152, %v2256
        %v2258 = vpop.f32.mrb[0].mxu0
        %2259 = vmatprep.mubr.f32.mxu0 0.0
        %2260 = vmatmul.mubr.f32.gmra.mrb[0].mxu0 %v2018
        %v2261 = vpop.f32.mrb[0].mxu0
        %v2262 = vadd.f32 %v2157, %v2261
        %v2263 = vpop.f32.mrb[0].mxu0
        %2264 = vmatprep.mubr.f32.mxu0 0.0
        %2265 = vmatmul.mubr.f32.gmra.mrb[0].mxu0 %v2019
        %v2266 = vpop.f32.mrb[0].mxu0
        %v2267 = vadd.f32 %v2162, %v2266
        %v2268 = vpop.f32.mrb[0].mxu0
        %2269 = vdwg.mxu0
        %2270 = vst.msk [vmem:[%s274] sm:$0xff] %vm299, %v2232
        %2271 = vst.msk [vmem:[%s274 + $0x8] sm:$0xff] %vm299, %v2237
        %2272 = vst.msk [vmem:[%s274 + $0x10] sm:$0xff] %vm299, %v2242
        %2273 = vst.msk [vmem:[%s274 + $0x18] sm:$0xff] %vm299, %v2247
        %2274 = vst.msk [vmem:[%s274 + $0x20] sm:$0xff] %vm299, %v2252
        %2275 = vst.msk [vmem:[%s274 + $0x28] sm:$0xff] %vm299, %v2257
        %2276 = vst.msk [vmem:[%s274 + $0x30] sm:$0xff] %vm299, %v2262
        %2277 = vst.msk [vmem:[%s274 + $0x38] sm:$0xff] %vm299, %v2267
        %s2278 = sand.u32 %s181, 1
        %s2279 = scalar_lea.sflag [#allocation7], %s2278
        %s2280 = sand.u32 %s181, 1
        %s2281 = smul.addr %s2280, 64
        %s2282 = scalar_lea.vmem [#allocation6], %s2281
        // Predicated region
        $region49: #{tpu_custom_call.1} parent=47 // pred_check
          %p2283 = pneg %p191
        $region50: #{tpu_custom_call.1} parent=47 // pred_check_branch
          %2285 = sbr.rel (%p2283) target = $region52
        $region51: #{tpu_custom_call.1} parent=47 // pred_region
          %s2286 = smul.u32 4, %s21
          %s2288 = ssub.s32 1024, 1024
          %2289 = vsyncadd %s2279, %s2288
          %s2290 = smul.addr %s2286, 2
          %s2291 = smul.addr %s2290, 128
          %s2292 = scalar_lea.hbm %s7, %s2291
          %s2293 = sshll.u32 %s2282, 4
          %s2294 = int_to_ptr.vmem [resolvable:$true] %s2293
          %2299 = dma.vmem_to_hbm [thread:$0]  %s2294, 1024, %s2292, %s2279, 128, 128, 8
        $region52: #{tpu_custom_call.1} parent=47 // pred_fallthru
          _
      $region48: #{tpu_custom_call.1} parent=5 // pred_fallthru
        _
      %p2300 = scmp.le.s32.totalorder 2, %s16
      // Predicated region
      $region53: #{tpu_custom_call.1} parent=5 // pred_check
        %p2301 = pneg %p2300
      $region54: #{tpu_custom_call.1} parent=5 // pred_check_branch
        %2303 = sbr.rel (%p2301) target = $region56
      $region55: #{tpu_custom_call.1} parent=5 // pred_region
        %s2304 = ssub.s32 %s16, 2
        // Predicated region
        $region57: #{tpu_custom_call.1} parent=55 // pred_check
          %p2305 = pneg %p197
        $region58: #{tpu_custom_call.1} parent=55 // pred_check_branch
          %2307 = sbr.rel (%p2305) target = $region60
        $region59: #{tpu_custom_call.1} parent=55 // pred_region
          %s2308 = sand.u32 %s182, 1
          %s2309 = scalar_lea.sflag [#allocation7], %s2308
          %s2310 = sand.u32 %s182, 1
          %s2311 = smul.addr %s2310, 64
          %s2312 = scalar_lea.vmem [#allocation6], %s2311
          %2313 = dma.done %s2309, 1024
        $region60: #{tpu_custom_call.1} parent=55 // pred_fallthru
          _
      $region56: #{tpu_custom_call.1} parent=5 // pred_fallthru
        _
    $region6: #{tpu_custom_call.1} parent=1 // loop_footer
      %s20 = sadd.s32 1, %s16
    $region7: #{tpu_custom_call.1} parent=1 // loop_footer_branch
      %15 = sbr.rel target = $region3
    $region8: #{tpu_custom_call.1} parent=1 // loop_exit
      _
    %2314 = vsyncpa [#allocation7], 1
    %s2315 = scalar_lea.sflag [#allocation7], 1
    %2316 = vsyncpa %s2315, 1

</llo_original>
